<compile_context>
chip_gen: v5e
topology: v5e:2x2
jax: 0.10.0
libtpu: 0.0.40
codegen_flags: <defaults>
</compile_context>

<pallas_src>
import jax
import jax.numpy as jnp
from jax.experimental import pallas as pl
from jax.experimental.pallas import tpu as pltpu


def _mlp_kernel(xT_ref, w0T_ref, b0T_ref, waT_ref, baT_ref, wbT_ref, bbT_ref,
                woT_ref, boT_ref, oT_ref):
    """All activations are (features, tile_n): batch on the lane axis."""
    cdt = w0T_ref.dtype                      # matmul operand dtype (bf16 or f32)

    # fc1 + tanh: (hidden, in_dim) @ (in_dim, tile_n) -> (hidden, tile_n)
    xT = xT_ref[...].astype(cdt)
    h = jnp.tanh(
        jnp.dot(w0T_ref[...], xT, preferred_element_type=jnp.float32)
        + b0T_ref[...])                      # f32

    # residual blocks: h = h + tanh(W2 tanh(W1 h + b1) + b2)  (static unroll)
    n_blocks = waT_ref.shape[0]
    for l in range(n_blocks):
        z = jnp.tanh(
            jnp.dot(waT_ref[l], h.astype(cdt),
                    preferred_element_type=jnp.float32) + baT_ref[l])
        z = jnp.tanh(
            jnp.dot(wbT_ref[l], z.astype(cdt),
                    preferred_element_type=jnp.float32) + bbT_ref[l])
        h = h + z

    # output layer: (out_dim, hidden) @ (hidden, tile_n) -> (out_dim, tile_n)
    # Lane-dense store: out_dim (=1) sits on sublanes, the batch on lanes.
    oT_ref[...] = (
        jnp.dot(woT_ref[...], h.astype(cdt),
                preferred_element_type=jnp.float32)
        + boT_ref[...]).astype(oT_ref.dtype)


def _default_matmul_dtype():
    """bf16 operands (f32 accumulate) on v6e/v7x; keep f32 on v5* parts."""
    try:
        kind = jax.devices()[0].device_kind.lower()
    except Exception:
        return jnp.bfloat16
    return jnp.float32 if "v5" in kind else jnp.bfloat16


def _encode_inputs_T(t, x, y, pos_enc):
    """Build the (in_dim, N) feature-major input matrix (torch feature order)."""
    def _row(v):
        return v.reshape(1, -1)
    inputs_T = jnp.concatenate([_row(t), _row(x), _row(y)], axis=0)   # (3, N)
    if pos_enc > 0:
        enc = [inputs_T]
        for i in range(1, pos_enc + 1):
            enc.append(jnp.sin((2.0 ** i) * jnp.pi * inputs_T))
            enc.append(jnp.cos((2.0 ** i) * jnp.pi * inputs_T))
        inputs_T = jnp.concatenate(enc, axis=0)
    return inputs_T.astype(jnp.float32)


def modified_mlp_forward(t, x, y, params, *, pos_enc=0, tile_n=512,
                         matmul_dtype=None):
    """Pallas forward pass. t, x, y: shape (N,) or (N, 1) float32 -> (N, out_dim)."""
    if matmul_dtype is None:
        matmul_dtype = _default_matmul_dtype()
    assert tile_n % 128 == 0, "tile_n must be a multiple of 128 (lane width)"

    inputs_T = _encode_inputs_T(t, x, y, pos_enc)            # (in_dim, N)
    in_dim, n = inputs_T.shape

    w0, b0, wa, ba, wb, bb, wo, bo = params
    out_dim = wo.shape[1]

    # Feature-major (PyTorch nn.Linear-style) weights; matmul operands in
    # matmul_dtype, biases stay f32 (added post-accumulation).
    w0T = w0.T.astype(matmul_dtype)                          # (hidden, in_dim)
    b0T = b0.T.astype(jnp.float32)                           # (hidden, 1)
    waT = jnp.transpose(wa, (0, 2, 1)).astype(matmul_dtype)  # (nb, r, hidden)
    baT = jnp.transpose(ba, (0, 2, 1)).astype(jnp.float32)   # (nb, r, 1)
    wbT = jnp.transpose(wb, (0, 2, 1)).astype(matmul_dtype)  # (nb, hidden, r)
    bbT = jnp.transpose(bb, (0, 2, 1)).astype(jnp.float32)   # (nb, hidden, 1)
    woT = wo.T.astype(matmul_dtype)                          # (out_dim, hidden)
    boT = bo.T.astype(jnp.float32)                           # (out_dim, 1)

    # Pad the batch (lane) axis up to a multiple of tile_n.
    n_pad = pl.cdiv(n, tile_n) * tile_n
    if n_pad != n:
        inputs_T = jnp.pad(inputs_T, ((0, 0), (0, n_pad - n)))

    grid = (n_pad // tile_n,)
    const2 = lambda i: (0, 0)
    const3 = lambda i: (0, 0, 0)

    out_T = pl.pallas_call(
        _mlp_kernel,
        out_shape=jax.ShapeDtypeStruct((out_dim, n_pad), jnp.float32),
        grid_spec=pltpu.PrefetchScalarGridSpec(
            num_scalar_prefetch=0,
            grid=grid,
            in_specs=[
                pl.BlockSpec((in_dim, tile_n), lambda i: (0, i)),  # input tile
                pl.BlockSpec(w0T.shape, const2),                   # fc1 W^T
                pl.BlockSpec(b0T.shape, const2),                   # fc1 b
                pl.BlockSpec(waT.shape, const3),                   # block W1^T
                pl.BlockSpec(baT.shape, const3),                   # block b1
                pl.BlockSpec(wbT.shape, const3),                   # block W2^T
                pl.BlockSpec(bbT.shape, const3),                   # block b2
                pl.BlockSpec(woT.shape, const2),                   # out W^T
                pl.BlockSpec(boT.shape, const2),                   # out b
            ],
            out_specs=pl.BlockSpec((out_dim, tile_n), lambda i: (0, i)),
        ),
        compiler_params=pltpu.CompilerParams(
            dimension_semantics=("parallel",),
            vmem_limit_bytes=32 * 1024 * 1024),
    )(inputs_T, w0T, b0T, waT, baT, wbT, bbT, woT, boT)

    return out_T.T[:n]                                       # (n, out_dim) f32


def init_params(key, *, input_dim=3, hidden_dim=64, n_layers=3, r=128,
                out_dim=1, pos_enc=0):
    """Init mirroring PyTorch nn.Linear default (U(-1/sqrt(fan_in), +1/sqrt(fan_in))).

    Weights stored (fan_in, fan_out); biases (1, fan_out).
    """
    if pos_enc > 0:
        input_dim = input_dim * (1 + 2 * pos_enc)
    n_blocks = n_layers - 1
    keys = jax.random.split(key, 4 + 4 * n_blocks)

    def lin(kw, kb, fan_in, fan_out):
        bound = 1.0 / jnp.sqrt(fan_in)
        w = jax.random.uniform(kw, (fan_in, fan_out), jnp.float32, -bound, bound)
        b = jax.random.uniform(kb, (1, fan_out), jnp.float32, -bound, bound)
        return w, b

    w0, b0 = lin(keys[0], keys[1], input_dim, hidden_dim)
    wa_l, ba_l, wb_l, bb_l = [], [], [], []
    for l in range(n_blocks):
        k0, k1, k2, k3 = keys[2 + 4 * l: 6 + 4 * l]
        w1, b1 = lin(k0, k1, hidden_dim, r)
        w2, b2 = lin(k2, k3, r, hidden_dim)
        wa_l.append(w1); ba_l.append(b1); wb_l.append(w2); bb_l.append(b2)
    wa = jnp.stack(wa_l); ba = jnp.stack(ba_l)
    wb = jnp.stack(wb_l); bb = jnp.stack(bb_l)
    wo, bo = lin(keys[-2], keys[-1], hidden_dim, out_dim)
    return (w0, b0, wa, ba, wb, bb, wo, bo)


def reference_forward(t, x, y, params, *, pos_enc=0, matmul_dtype=jnp.float32):
    """Pure-JAX reference (batch-major), mirroring the kernel's operand dtypes."""
    def _col(v):
        return v[:, None] if v.ndim == 1 else v
    inputs = jnp.concatenate([_col(t), _col(x), _col(y)], axis=1)
    if pos_enc > 0:
        enc = [inputs]
        for i in range(1, pos_enc + 1):
            enc.append(jnp.sin((2.0 ** i) * jnp.pi * inputs))
            enc.append(jnp.cos((2.0 ** i) * jnp.pi * inputs))
        inputs = jnp.concatenate(enc, axis=-1)
    w0, b0, wa, ba, wb, bb, wo, bo = params
    c = lambda a: a.astype(matmul_dtype)
    h = jnp.tanh(jnp.dot(c(inputs), c(w0),
                         preferred_element_type=jnp.float32) + b0)
    for l in range(wa.shape[0]):
        z = jnp.tanh(jnp.dot(c(h), c(wa[l]),
                             preferred_element_type=jnp.float32) + ba[l])
        z = jnp.tanh(jnp.dot(c(z), c(wb[l]),
                             preferred_element_type=jnp.float32) + bb[l])
        h = h + z
    return jnp.dot(c(h), c(wo), preferred_element_type=jnp.float32) + bo


if __name__ == "__main__":
    key = jax.random.PRNGKey(0)
    k_params, k_t, k_x, k_y = jax.random.split(key, 4)

    # --- case 1: f32 matmul operands, no positional encoding, multi-tile grid
    N1 = 1000
    t1 = jax.random.normal(k_t, (N1,), jnp.float32)
    x1 = jax.random.normal(k_x, (N1,), jnp.float32)
    y1 = jax.random.normal(k_y, (N1,), jnp.float32)
    params1 = init_params(k_params, input_dim=3, hidden_dim=64, n_layers=3,
                          r=128, out_dim=1, pos_enc=0)

    out1 = modified_mlp_forward(t1, x1, y1, params1, pos_enc=0, tile_n=256,
                                matmul_dtype=jnp.float32)
    out1 = jax.block_until_ready(out1)
    ref1 = reference_forward(t1, x1, y1, params1, pos_enc=0,
                             matmul_dtype=jnp.float32)
    assert out1.shape == (N1, 1), out1.shape
    err1 = float(jnp.max(jnp.abs(out1 - ref1)))
    assert jnp.allclose(out1, ref1, atol=2e-4, rtol=2e-4), f"f32 max err {err1}"

    # --- case 2: auto matmul dtype (bf16 on v6e/v7x, f32 on v5*), pos_enc=2;
    #     exercises batch padding (200 -> 256) and the encoded-input path.
    N2 = 200
    t2 = jax.random.normal(jax.random.fold_in(k_t, 1), (N2,), jnp.float32)
    x2 = jax.random.normal(jax.random.fold_in(k_x, 1), (N2,), jnp.float32)
    y2 = jax.random.normal(jax.random.fold_in(k_y, 1), (N2,), jnp.float32)
    params2 = init_params(jax.random.fold_in(k_params, 1), input_dim=3,
                          hidden_dim=64, n_layers=3, r=128, out_dim=1,
                          pos_enc=2)

    mm_dtype = _default_matmul_dtype()
    out2 = modified_mlp_forward(t2, x2, y2, params2, pos_enc=2, tile_n=128)
    out2 = jax.block_until_ready(out2)
    ref2 = reference_forward(t2, x2, y2, params2, pos_enc=2,
                             matmul_dtype=mm_dtype)
    assert out2.shape == (N2, 1), out2.shape
    err2 = float(jnp.max(jnp.abs(out2 - ref2)))
    tol = 2e-4 if mm_dtype == jnp.float32 else 3e-2
    assert jnp.allclose(out2, ref2, atol=tol, rtol=tol), f"auto max err {err2}"

    print("KERNEL_OK")
</pallas_src>

<mosaic_0001>
module attributes {stable_mosaic.version = 11 : i64} {
  func.func @_mlp_kernel(%arg0: i32, %arg1: memref<3x256xf32, #tpu.memory_space<vmem>>, %arg2: memref<64x3xf32, #tpu.memory_space<vmem>>, %arg3: memref<64x1xf32, #tpu.memory_space<vmem>>, %arg4: memref<2x128x64xf32, #tpu.memory_space<vmem>>, %arg5: memref<2x128x1xf32, #tpu.memory_space<vmem>>, %arg6: memref<2x64x128xf32, #tpu.memory_space<vmem>>, %arg7: memref<2x64x1xf32, #tpu.memory_space<vmem>>, %arg8: memref<1x64xf32, #tpu.memory_space<vmem>>, %arg9: memref<1x1xf32, #tpu.memory_space<vmem>>, %arg10: memref<1x256xf32, #tpu.memory_space<vmem>>) attributes {dimension_semantics = [#tpu.dimension_semantics<parallel>], iteration_bounds = array<i64: 4>, scalar_prefetch = 0 : i64, scratch_operands = 0 : i64, tpu.core_type = #tpu.core_type<tc>, window_params = [{transform_indices = @transform_0, window_bounds = array<i64: 3, 256>}, {pipeline_mode = #tpu.pipeline_mode<synchronous>, transform_indices = @transform_1, window_bounds = array<i64: 64, 3>}, {pipeline_mode = #tpu.pipeline_mode<synchronous>, transform_indices = @transform_2, window_bounds = array<i64: 64, 1>}, {pipeline_mode = #tpu.pipeline_mode<synchronous>, transform_indices = @transform_3, window_bounds = array<i64: 2, 128, 64>}, {pipeline_mode = #tpu.pipeline_mode<synchronous>, transform_indices = @transform_4, window_bounds = array<i64: 2, 128, 1>}, {pipeline_mode = #tpu.pipeline_mode<synchronous>, transform_indices = @transform_5, window_bounds = array<i64: 2, 64, 128>}, {pipeline_mode = #tpu.pipeline_mode<synchronous>, transform_indices = @transform_6, window_bounds = array<i64: 2, 64, 1>}, {pipeline_mode = #tpu.pipeline_mode<synchronous>, transform_indices = @transform_7, window_bounds = array<i64: 1, 64>}, {pipeline_mode = #tpu.pipeline_mode<synchronous>, transform_indices = @transform_8, window_bounds = array<i64: 1, 1>}, {transform_indices = @transform_9, window_bounds = array<i64: 1, 256>}]} {
    %c0 = arith.constant 0 : index
    %c0_0 = arith.constant 0 : index
    %0 = vector.load %arg1[%c0, %c0_0] : memref<3x256xf32, #tpu.memory_space<vmem>>, vector<3x256xf32>
    %c0_1 = arith.constant 0 : index
    %c0_2 = arith.constant 0 : index
    %1 = vector.load %arg2[%c0_1, %c0_2] : memref<64x3xf32, #tpu.memory_space<vmem>>, vector<64x3xf32>
    %cst = arith.constant dense<0.000000e+00> : vector<64x256xf32>
    %2 = tpu.matmul %1, %0, %cst {dimension_numbers = #tpu.dot_dimension_numbers<[1], [0], [0], [1], [0, 0, 1, 1], [], []>} : vector<64x3xf32>, vector<3x256xf32>, vector<64x256xf32> -> vector<64x256xf32>
    %c0_3 = arith.constant 0 : index
    %c0_4 = arith.constant 0 : index
    %3 = vector.load %arg3[%c0_3, %c0_4] : memref<64x1xf32, #tpu.memory_space<vmem>>, vector<64x1xf32>
    %4 = vector.broadcast %3 : vector<64x1xf32> to vector<64x256xf32>
    %5 = arith.addf %2, %4 : vector<64x256xf32>
    %6 = math.tanh %5 : vector<64x256xf32>
    %c0_5 = arith.constant 0 : index
    %c0_6 = arith.constant 0 : index
    %c0_7 = arith.constant 0 : index
    %7 = vector.load %arg4[%c0_5, %c0_6, %c0_7] : memref<2x128x64xf32, #tpu.memory_space<vmem>>, vector<1x128x64xf32>
    %8 = vector.shape_cast %7 : vector<1x128x64xf32> to vector<128x64xf32>
    %cst_8 = arith.constant dense<0.000000e+00> : vector<128x256xf32>
    %9 = tpu.matmul %8, %6, %cst_8 {dimension_numbers = #tpu.dot_dimension_numbers<[1], [0], [0], [1], [0, 0, 1, 1], [], []>} : vector<128x64xf32>, vector<64x256xf32>, vector<128x256xf32> -> vector<128x256xf32>
    %c0_9 = arith.constant 0 : index
    %c0_10 = arith.constant 0 : index
    %c0_11 = arith.constant 0 : index
    %10 = vector.load %arg5[%c0_9, %c0_10, %c0_11] : memref<2x128x1xf32, #tpu.memory_space<vmem>>, vector<1x128x1xf32>
    %11 = vector.shape_cast %10 : vector<1x128x1xf32> to vector<128x1xf32>
    %12 = vector.broadcast %11 : vector<128x1xf32> to vector<128x256xf32>
    %13 = arith.addf %9, %12 : vector<128x256xf32>
    %14 = math.tanh %13 : vector<128x256xf32>
    %c0_12 = arith.constant 0 : index
    %c0_13 = arith.constant 0 : index
    %c0_14 = arith.constant 0 : index
    %15 = vector.load %arg6[%c0_12, %c0_13, %c0_14] : memref<2x64x128xf32, #tpu.memory_space<vmem>>, vector<1x64x128xf32>
    %16 = vector.shape_cast %15 : vector<1x64x128xf32> to vector<64x128xf32>
    %cst_15 = arith.constant dense<0.000000e+00> : vector<64x256xf32>
    %17 = tpu.matmul %16, %14, %cst_15 {dimension_numbers = #tpu.dot_dimension_numbers<[1], [0], [0], [1], [0, 0, 1, 1], [], []>} : vector<64x128xf32>, vector<128x256xf32>, vector<64x256xf32> -> vector<64x256xf32>
    %c0_16 = arith.constant 0 : index
    %c0_17 = arith.constant 0 : index
    %c0_18 = arith.constant 0 : index
    %18 = vector.load %arg7[%c0_16, %c0_17, %c0_18] : memref<2x64x1xf32, #tpu.memory_space<vmem>>, vector<1x64x1xf32>
    %19 = vector.shape_cast %18 : vector<1x64x1xf32> to vector<64x1xf32>
    %20 = vector.broadcast %19 : vector<64x1xf32> to vector<64x256xf32>
    %21 = arith.addf %17, %20 : vector<64x256xf32>
    %22 = math.tanh %21 : vector<64x256xf32>
    %23 = arith.addf %6, %22 : vector<64x256xf32>
    %c1 = arith.constant 1 : index
    %c0_19 = arith.constant 0 : index
    %c0_20 = arith.constant 0 : index
    %24 = vector.load %arg4[%c1, %c0_19, %c0_20] : memref<2x128x64xf32, #tpu.memory_space<vmem>>, vector<1x128x64xf32>
    %25 = vector.shape_cast %24 : vector<1x128x64xf32> to vector<128x64xf32>
    %cst_21 = arith.constant dense<0.000000e+00> : vector<128x256xf32>
    %26 = tpu.matmul %25, %23, %cst_21 {dimension_numbers = #tpu.dot_dimension_numbers<[1], [0], [0], [1], [0, 0, 1, 1], [], []>} : vector<128x64xf32>, vector<64x256xf32>, vector<128x256xf32> -> vector<128x256xf32>
    %c1_22 = arith.constant 1 : index
    %c0_23 = arith.constant 0 : index
    %c0_24 = arith.constant 0 : index
    %27 = vector.load %arg5[%c1_22, %c0_23, %c0_24] : memref<2x128x1xf32, #tpu.memory_space<vmem>>, vector<1x128x1xf32>
    %28 = vector.shape_cast %27 : vector<1x128x1xf32> to vector<128x1xf32>
    %29 = vector.broadcast %28 : vector<128x1xf32> to vector<128x256xf32>
    %30 = arith.addf %26, %29 : vector<128x256xf32>
    %31 = math.tanh %30 : vector<128x256xf32>
    %c1_25 = arith.constant 1 : index
    %c0_26 = arith.constant 0 : index
    %c0_27 = arith.constant 0 : index
    %32 = vector.load %arg6[%c1_25, %c0_26, %c0_27] : memref<2x64x128xf32, #tpu.memory_space<vmem>>, vector<1x64x128xf32>
    %33 = vector.shape_cast %32 : vector<1x64x128xf32> to vector<64x128xf32>
    %cst_28 = arith.constant dense<0.000000e+00> : vector<64x256xf32>
    %34 = tpu.matmul %33, %31, %cst_28 {dimension_numbers = #tpu.dot_dimension_numbers<[1], [0], [0], [1], [0, 0, 1, 1], [], []>} : vector<64x128xf32>, vector<128x256xf32>, vector<64x256xf32> -> vector<64x256xf32>
    %c1_29 = arith.constant 1 : index
    %c0_30 = arith.constant 0 : index
    %c0_31 = arith.constant 0 : index
    %35 = vector.load %arg7[%c1_29, %c0_30, %c0_31] : memref<2x64x1xf32, #tpu.memory_space<vmem>>, vector<1x64x1xf32>
    %36 = vector.shape_cast %35 : vector<1x64x1xf32> to vector<64x1xf32>
    %37 = vector.broadcast %36 : vector<64x1xf32> to vector<64x256xf32>
    %38 = arith.addf %34, %37 : vector<64x256xf32>
    %39 = math.tanh %38 : vector<64x256xf32>
    %40 = arith.addf %23, %39 : vector<64x256xf32>
    %c0_32 = arith.constant 0 : index
    %c0_33 = arith.constant 0 : index
    %41 = vector.load %arg8[%c0_32, %c0_33] : memref<1x64xf32, #tpu.memory_space<vmem>>, vector<1x64xf32>
    %cst_34 = arith.constant dense<0.000000e+00> : vector<1x256xf32>
    %42 = tpu.matmul %41, %40, %cst_34 {dimension_numbers = #tpu.dot_dimension_numbers<[1], [0], [0], [1], [0, 0, 1, 1], [], []>} : vector<1x64xf32>, vector<64x256xf32>, vector<1x256xf32> -> vector<1x256xf32>
    %c0_35 = arith.constant 0 : index
    %c0_36 = arith.constant 0 : index
    %43 = vector.load %arg9[%c0_35, %c0_36] : memref<1x1xf32, #tpu.memory_space<vmem>>, vector<1x1xf32>
    %44 = vector.broadcast %43 : vector<1x1xf32> to vector<1x256xf32>
    %45 = arith.addf %42, %44 : vector<1x256xf32>
    %c0_37 = arith.constant 0 : index
    %c0_38 = arith.constant 0 : index
    %46 = vector.load %arg10[%c0_37, %c0_38] : memref<1x256xf32, #tpu.memory_space<vmem>>, vector<1x256xf32>
    tpu.vector_store %arg10[%c0_37, %c0_38], %45 {strides = array<i32>} : memref<1x256xf32, #tpu.memory_space<vmem>>, vector<1x256xf32>,
    return
  }
  func.func @transform_0(%arg0: i32) -> (i32, i32) {
    %c0_i32 = arith.constant 0 : i32
    %c0_i32_0 = arith.constant 0 : i32
    return %c0_i32, %arg0 : i32, i32
  }
  func.func @transform_1(%arg0: i32) -> (i32, i32) {
    %c0_i32 = arith.constant 0 : i32
    %c0_i32_0 = arith.constant 0 : i32
    %c0_i32_1 = arith.constant 0 : i32
    return %c0_i32, %c0_i32_0 : i32, i32
  }
  func.func @transform_2(%arg0: i32) -> (i32, i32) {
    %c0_i32 = arith.constant 0 : i32
    %c0_i32_0 = arith.constant 0 : i32
    %c0_i32_1 = arith.constant 0 : i32
    return %c0_i32, %c0_i32_0 : i32, i32
  }
  func.func @transform_3(%arg0: i32) -> (i32, i32, i32) {
    %c0_i32 = arith.constant 0 : i32
    %c0_i32_0 = arith.constant 0 : i32
    %c0_i32_1 = arith.constant 0 : i32
    %c0_i32_2 = arith.constant 0 : i32
    return %c0_i32, %c0_i32_0, %c0_i32_1 : i32, i32, i32
  }
  func.func @transform_4(%arg0: i32) -> (i32, i32, i32) {
    %c0_i32 = arith.constant 0 : i32
    %c0_i32_0 = arith.constant 0 : i32
    %c0_i32_1 = arith.constant 0 : i32
    %c0_i32_2 = arith.constant 0 : i32
    return %c0_i32, %c0_i32_0, %c0_i32_1 : i32, i32, i32
  }
  func.func @transform_5(%arg0: i32) -> (i32, i32, i32) {
    %c0_i32 = arith.constant 0 : i32
    %c0_i32_0 = arith.constant 0 : i32
    %c0_i32_1 = arith.constant 0 : i32
    %c0_i32_2 = arith.constant 0 : i32
    return %c0_i32, %c0_i32_0, %c0_i32_1 : i32, i32, i32
  }
  func.func @transform_6(%arg0: i32) -> (i32, i32, i32) {
    %c0_i32 = arith.constant 0 : i32
    %c0_i32_0 = arith.constant 0 : i32
    %c0_i32_1 = arith.constant 0 : i32
    %c0_i32_2 = arith.constant 0 : i32
    return %c0_i32, %c0_i32_0, %c0_i32_1 : i32, i32, i32
  }
  func.func @transform_7(%arg0: i32) -> (i32, i32) {
    %c0_i32 = arith.constant 0 : i32
    %c0_i32_0 = arith.constant 0 : i32
    %c0_i32_1 = arith.constant 0 : i32
    return %c0_i32, %c0_i32_0 : i32, i32
  }
  func.func @transform_8(%arg0: i32) -> (i32, i32) {
    %c0_i32 = arith.constant 0 : i32
    %c0_i32_0 = arith.constant 0 : i32
    %c0_i32_1 = arith.constant 0 : i32
    return %c0_i32, %c0_i32_0 : i32, i32
  }
  func.func @transform_9(%arg0: i32) -> (i32, i32) {
    %c0_i32 = arith.constant 0 : i32
    %c0_i32_0 = arith.constant 0 : i32
    return %c0_i32, %arg0 : i32, i32
  }
}

</mosaic_0001>

<llo_original>
// kernel: tpu_custom_call.1
$region0: #{tpu_custom_call.1}
  #allocation0 [shape = 'u32[]', space=smem, size = 0x4, offset = 0x4, fixed_abs, tag = 'smem constant byte address 0x4 - core index']
  #allocation1 [shape = 'u32[72,128]{1,0:T(1,128)}', space=vmem, size = 0x9000, scoped, tag = 'internal scratch']
  #allocation2 [shape = 'f32[1,1]{1,0:T(1,128)S(1)}', space=vmem, size = 0x200, scoped, tag = 'scoped memory for tpu_custom_call.1']
  %s0 = inlined_call_operand.vmem [shape: f32[3,1024], index: 0, kind: input, shape index: {}]
  %s1 = inlined_call_operand.vmem [shape: f32[64,3], index: 1, kind: input, shape index: {}]
  %s2 = inlined_call_operand.vmem [shape: f32[64,1], index: 2, kind: input, shape index: {}]
  %s3 = inlined_call_operand.vmem [shape: f32[2,128,64], index: 3, kind: input, shape index: {}]
  %s4 = inlined_call_operand.vmem [shape: f32[2,128,1], index: 4, kind: input, shape index: {}]
  %s5 = inlined_call_operand.vmem [shape: f32[2,64,128], index: 5, kind: input, shape index: {}]
  %s6 = inlined_call_operand.vmem [shape: f32[2,64,1], index: 6, kind: input, shape index: {}]
  %s7 = inlined_call_operand.vmem [shape: f32[1,64], index: 7, kind: input, shape index: {}]
  %s8 = inlined_call_operand.<no memory space> [shape: f32[1,1], index: 8, kind: input, shape index: {}]
  %s9 = inlined_call_operand.hbm [shape: f32[1,1024], index: 9, kind: output, shape index: {}]
  %s10 = sld [smem:[#allocation0]]
  $region69: #{tpu_custom_call.1} parent=0
    _
  %s12 = ssub.s32 1, %s10
  %s13 = scalar_select 0, %s12, %s10
  %v14 = vstv %s8
  %15 = vst [vmem:[#allocation2] sm:$0x1] %v14
  $region1: #{tpu_custom_call.1} parent=0
    #allocation3 [shape = 'u8[2048]{0}', space=vmem, size = 0x800, scoped, tag = 'output window, operand 0']
    #allocation4 [shape = 's32[2]{0}', space=sflag, size = 0x8, scoped, tag = 'scoped memory for tpu_custom_call.1']
    %16 = vsyncpa [#allocation4], 0
    %s17 = scalar_lea.sflag [#allocation4], 1
    %18 = vsyncpa %s17, 0
    loop: start=0, step=1, limit=6
    $region2: #{tpu_custom_call.1} parent=1 // loop_pre_header
      _
    $region3: #{tpu_custom_call.1} parent=1 // loop_header
      %s20 = sphi 0, %s24
      %p21 = scmp.ge.s32.totalorder %s20, 6
      %s30 = sphi 0, %s32
      %s33 = sphi 0, %s30
      %s34 = sphi 0, %s33
      %s50 = sphi 0, %s34
      %s54 = sphi 0, %s54
      %s56 = sphi 0, %s54
      %s57 = sphi 0, %s56
      %s71 = sphi 0, %s57
      %s75 = sphi 0, %s75
      %s77 = sphi 0, %s75
      %s78 = sphi 0, %s77
      %s92 = sphi 0, %s78
      %s96 = sphi 0, %s96
      %s98 = sphi 0, %s96
      %s99 = sphi 0, %s98
      %s113 = sphi 0, %s99
      %s117 = sphi 0, %s117
      %s119 = sphi 0, %s117
      %s120 = sphi 0, %s119
      %s134 = sphi 0, %s120
      %s138 = sphi 0, %s138
      %s140 = sphi 0, %s138
      %s141 = sphi 0, %s140
      %s155 = sphi 0, %s141
      %s159 = sphi 0, %s159
      %s161 = sphi 0, %s159
      %s162 = sphi 0, %s161
      %s176 = sphi 0, %s162
      %s180 = sphi 0, %s180
      %s182 = sphi 0, %s180
      %s183 = sphi 0, %s182
      %s197 = sphi 0, %s183
      %s201 = sphi 0, %s201
      %s203 = sphi 0, %s201
      %s204 = sphi 0, %s203
      %s218 = sphi 0, %s204
      %s224 = sphi 0, %s226
      %s227 = sphi 0, %s224
      %s228 = sphi 0, %s227
      %s244 = sphi 0, %s228
    $region4: #{tpu_custom_call.1} parent=1 // loop_header_branch
      %23 = sbr.rel (%p21) target = $region8
    $region5: #{tpu_custom_call.1} parent=1 // loop_body
      %s25 = ssub.s32 %s20, 1
      %s26 = ssub.s32 %s20, 2
      %s27 = sadd.s32 %s20, 1
      %s28 = ssub.s32 %s20, %s27
      %p29 = scmp.eq.s32.totalorder %s28, 0
      %s31 = sadd.s32 %s30, 1
      %s32 = scalar_select %p29, %s30, %s31
      %p35 = pneg %p29
      %p36 = scmp.eq.s32.totalorder %s20, 3
      %p37 = por %p35, %p36
      %p38 = scmp.ne.s32.totalorder %s30, %s33
      %p39 = scmp.eq.s32.totalorder %s20, 0
      %p40 = por %p38, %p39
      %p41 = scmp.ne.s32.totalorder %s30, %s33
      %p42 = scmp.eq.s32.totalorder %s25, 3
      %p43 = por %p41, %p42
      %p44 = scmp.ne.s32.totalorder %s33, %s34
      %p45 = scmp.eq.s32.totalorder %s25, 0
      %p46 = por %p44, %p45
      %p47 = scmp.ne.s32.totalorder %s33, %s34
      %p48 = scmp.eq.s32.totalorder %s26, 3
      %p49 = por %p47, %p48
      %p51 = scmp.ne.s32.totalorder %s34, %s50
      %p52 = scmp.eq.s32.totalorder %s26, 0
      %p53 = por %p51, %p52
      %s55 = sadd.s32 %s54, 1
      %p58 = scmp.eq.s32.totalorder %s20, 3
      %p59 = scmp.ne.s32.totalorder %s54, %s56
      %p60 = scmp.eq.s32.totalorder %s20, 0
      %p61 = por %p59, %p60
      %p62 = scmp.ne.s32.totalorder %s54, %s56
      %p63 = scmp.eq.s32.totalorder %s25, 3
      %p64 = por %p62, %p63
      %p65 = scmp.ne.s32.totalorder %s56, %s57
      %p66 = scmp.eq.s32.totalorder %s25, 0
      %p67 = por %p65, %p66
      %p68 = scmp.ne.s32.totalorder %s56, %s57
      %p69 = scmp.eq.s32.totalorder %s26, 3
      %p70 = por %p68, %p69
      %p72 = scmp.ne.s32.totalorder %s57, %s71
      %p73 = scmp.eq.s32.totalorder %s26, 0
      %p74 = por %p72, %p73
      %s76 = sadd.s32 %s75, 1
      %p79 = scmp.eq.s32.totalorder %s20, 3
      %p80 = scmp.ne.s32.totalorder %s75, %s77
      %p81 = scmp.eq.s32.totalorder %s20, 0
      %p82 = por %p80, %p81
      %p83 = scmp.ne.s32.totalorder %s75, %s77
      %p84 = scmp.eq.s32.totalorder %s25, 3
      %p85 = por %p83, %p84
      %p86 = scmp.ne.s32.totalorder %s77, %s78
      %p87 = scmp.eq.s32.totalorder %s25, 0
      %p88 = por %p86, %p87
      %p89 = scmp.ne.s32.totalorder %s77, %s78
      %p90 = scmp.eq.s32.totalorder %s26, 3
      %p91 = por %p89, %p90
      %p93 = scmp.ne.s32.totalorder %s78, %s92
      %p94 = scmp.eq.s32.totalorder %s26, 0
      %p95 = por %p93, %p94
      %s97 = sadd.s32 %s96, 1
      %p100 = scmp.eq.s32.totalorder %s20, 3
      %p101 = scmp.ne.s32.totalorder %s96, %s98
      %p102 = scmp.eq.s32.totalorder %s20, 0
      %p103 = por %p101, %p102
      %p104 = scmp.ne.s32.totalorder %s96, %s98
      %p105 = scmp.eq.s32.totalorder %s25, 3
      %p106 = por %p104, %p105
      %p107 = scmp.ne.s32.totalorder %s98, %s99
      %p108 = scmp.eq.s32.totalorder %s25, 0
      %p109 = por %p107, %p108
      %p110 = scmp.ne.s32.totalorder %s98, %s99
      %p111 = scmp.eq.s32.totalorder %s26, 3
      %p112 = por %p110, %p111
      %p114 = scmp.ne.s32.totalorder %s99, %s113
      %p115 = scmp.eq.s32.totalorder %s26, 0
      %p116 = por %p114, %p115
      %s118 = sadd.s32 %s117, 1
      %p121 = scmp.eq.s32.totalorder %s20, 3
      %p122 = scmp.ne.s32.totalorder %s117, %s119
      %p123 = scmp.eq.s32.totalorder %s20, 0
      %p124 = por %p122, %p123
      %p125 = scmp.ne.s32.totalorder %s117, %s119
      %p126 = scmp.eq.s32.totalorder %s25, 3
      %p127 = por %p125, %p126
      %p128 = scmp.ne.s32.totalorder %s119, %s120
      %p129 = scmp.eq.s32.totalorder %s25, 0
      %p130 = por %p128, %p129
      %p131 = scmp.ne.s32.totalorder %s119, %s120
      %p132 = scmp.eq.s32.totalorder %s26, 3
      %p133 = por %p131, %p132
      %p135 = scmp.ne.s32.totalorder %s120, %s134
      %p136 = scmp.eq.s32.totalorder %s26, 0
      %p137 = por %p135, %p136
      %s139 = sadd.s32 %s138, 1
      %p142 = scmp.eq.s32.totalorder %s20, 3
      %p143 = scmp.ne.s32.totalorder %s138, %s140
      %p144 = scmp.eq.s32.totalorder %s20, 0
      %p145 = por %p143, %p144
      %p146 = scmp.ne.s32.totalorder %s138, %s140
      %p147 = scmp.eq.s32.totalorder %s25, 3
      %p148 = por %p146, %p147
      %p149 = scmp.ne.s32.totalorder %s140, %s141
      %p150 = scmp.eq.s32.totalorder %s25, 0
      %p151 = por %p149, %p150
      %p152 = scmp.ne.s32.totalorder %s140, %s141
      %p153 = scmp.eq.s32.totalorder %s26, 3
      %p154 = por %p152, %p153
      %p156 = scmp.ne.s32.totalorder %s141, %s155
      %p157 = scmp.eq.s32.totalorder %s26, 0
      %p158 = por %p156, %p157
      %s160 = sadd.s32 %s159, 1
      %p163 = scmp.eq.s32.totalorder %s20, 3
      %p164 = scmp.ne.s32.totalorder %s159, %s161
      %p165 = scmp.eq.s32.totalorder %s20, 0
      %p166 = por %p164, %p165
      %p167 = scmp.ne.s32.totalorder %s159, %s161
      %p168 = scmp.eq.s32.totalorder %s25, 3
      %p169 = por %p167, %p168
      %p170 = scmp.ne.s32.totalorder %s161, %s162
      %p171 = scmp.eq.s32.totalorder %s25, 0
      %p172 = por %p170, %p171
      %p173 = scmp.ne.s32.totalorder %s161, %s162
      %p174 = scmp.eq.s32.totalorder %s26, 3
      %p175 = por %p173, %p174
      %p177 = scmp.ne.s32.totalorder %s162, %s176
      %p178 = scmp.eq.s32.totalorder %s26, 0
      %p179 = por %p177, %p178
      %s181 = sadd.s32 %s180, 1
      %p184 = scmp.eq.s32.totalorder %s20, 3
      %p185 = scmp.ne.s32.totalorder %s180, %s182
      %p186 = scmp.eq.s32.totalorder %s20, 0
      %p187 = por %p185, %p186
      %p188 = scmp.ne.s32.totalorder %s180, %s182
      %p189 = scmp.eq.s32.totalorder %s25, 3
      %p190 = por %p188, %p189
      %p191 = scmp.ne.s32.totalorder %s182, %s183
      %p192 = scmp.eq.s32.totalorder %s25, 0
      %p193 = por %p191, %p192
      %p194 = scmp.ne.s32.totalorder %s182, %s183
      %p195 = scmp.eq.s32.totalorder %s26, 3
      %p196 = por %p194, %p195
      %p198 = scmp.ne.s32.totalorder %s183, %s197
      %p199 = scmp.eq.s32.totalorder %s26, 0
      %p200 = por %p198, %p199
      %s202 = sadd.s32 %s201, 1
      %p205 = scmp.eq.s32.totalorder %s20, 3
      %p206 = scmp.ne.s32.totalorder %s201, %s203
      %p207 = scmp.eq.s32.totalorder %s20, 0
      %p208 = por %p206, %p207
      %p209 = scmp.ne.s32.totalorder %s201, %s203
      %p210 = scmp.eq.s32.totalorder %s25, 3
      %p211 = por %p209, %p210
      %p212 = scmp.ne.s32.totalorder %s203, %s204
      %p213 = scmp.eq.s32.totalorder %s25, 0
      %p214 = por %p212, %p213
      %p215 = scmp.ne.s32.totalorder %s203, %s204
      %p216 = scmp.eq.s32.totalorder %s26, 3
      %p217 = por %p215, %p216
      %p219 = scmp.ne.s32.totalorder %s204, %s218
      %p220 = scmp.eq.s32.totalorder %s26, 0
      %p221 = por %p219, %p220
      %s222 = ssub.s32 %s20, %s27
      %p223 = scmp.eq.s32.totalorder %s222, 0
      %s225 = sadd.s32 %s224, 1
      %s226 = scalar_select %p223, %s224, %s225
      %p229 = pneg %p223
      %p230 = scmp.eq.s32.totalorder %s20, 3
      %p231 = por %p229, %p230
      %p232 = scmp.ne.s32.totalorder %s224, %s227
      %p233 = scmp.eq.s32.totalorder %s20, 0
      %p234 = por %p232, %p233
      %p235 = scmp.ne.s32.totalorder %s224, %s227
      %p236 = scmp.eq.s32.totalorder %s25, 3
      %p237 = por %p235, %p236
      %p238 = scmp.ne.s32.totalorder %s227, %s228
      %p239 = scmp.eq.s32.totalorder %s25, 0
      %p240 = por %p238, %p239
      %p241 = scmp.ne.s32.totalorder %s227, %s228
      %p242 = scmp.eq.s32.totalorder %s26, 3
      %p243 = por %p241, %p242
      %p245 = scmp.ne.s32.totalorder %s228, %s244
      %p246 = scmp.eq.s32.totalorder %s26, 0
      %p247 = por %p245, %p246
      %p248 = scmp.le.s32.totalorder 1, %s20
      %p249 = scmp.lt.s32.totalorder %s20, 5
      %p250 = pnand %p248, %p249
      %p251 = pneg %p250
      // Predicated region
      $region9: #{tpu_custom_call.1} parent=5 // pred_check
        _
      $region10: #{tpu_custom_call.1} parent=5 // pred_check_branch
        %253 = sbr.rel (%p250) target = $region12
      $region11: #{tpu_custom_call.1} parent=5 // pred_region
        %s254 = ssub.s32 %s20, 1
        // Predicated region
        $region13: #{tpu_custom_call.1} parent=11 // pred_check
          %p255 = pneg %p67
        $region14: #{tpu_custom_call.1} parent=11 // pred_check_branch
          %257 = sbr.rel (%p255) target = $region16
        $region15: #{tpu_custom_call.1} parent=11 // pred_region
          _
        $region16: #{tpu_custom_call.1} parent=11 // pred_fallthru
          _
        // Predicated region
        $region17: #{tpu_custom_call.1} parent=11 // pred_check
          %p258 = pneg %p88
        $region18: #{tpu_custom_call.1} parent=11 // pred_check_branch
          %260 = sbr.rel (%p258) target = $region20
        $region19: #{tpu_custom_call.1} parent=11 // pred_region
          _
        $region20: #{tpu_custom_call.1} parent=11 // pred_fallthru
          _
        // Predicated region
        $region21: #{tpu_custom_call.1} parent=11 // pred_check
          %p261 = pneg %p109
        $region22: #{tpu_custom_call.1} parent=11 // pred_check_branch
          %263 = sbr.rel (%p261) target = $region24
        $region23: #{tpu_custom_call.1} parent=11 // pred_region
          _
        $region24: #{tpu_custom_call.1} parent=11 // pred_fallthru
          _
        // Predicated region
        $region25: #{tpu_custom_call.1} parent=11 // pred_check
          %p264 = pneg %p130
        $region26: #{tpu_custom_call.1} parent=11 // pred_check_branch
          %266 = sbr.rel (%p264) target = $region28
        $region27: #{tpu_custom_call.1} parent=11 // pred_region
          _
        $region28: #{tpu_custom_call.1} parent=11 // pred_fallthru
          _
        // Predicated region
        $region29: #{tpu_custom_call.1} parent=11 // pred_check
          %p267 = pneg %p151
        $region30: #{tpu_custom_call.1} parent=11 // pred_check_branch
          %269 = sbr.rel (%p267) target = $region32
        $region31: #{tpu_custom_call.1} parent=11 // pred_region
          _
        $region32: #{tpu_custom_call.1} parent=11 // pred_fallthru
          _
        // Predicated region
        $region33: #{tpu_custom_call.1} parent=11 // pred_check
          %p270 = pneg %p172
        $region34: #{tpu_custom_call.1} parent=11 // pred_check_branch
          %272 = sbr.rel (%p270) target = $region36
        $region35: #{tpu_custom_call.1} parent=11 // pred_region
          _
        $region36: #{tpu_custom_call.1} parent=11 // pred_fallthru
          _
        // Predicated region
        $region37: #{tpu_custom_call.1} parent=11 // pred_check
          %p273 = pneg %p193
        $region38: #{tpu_custom_call.1} parent=11 // pred_check_branch
          %275 = sbr.rel (%p273) target = $region40
        $region39: #{tpu_custom_call.1} parent=11 // pred_region
          _
        $region40: #{tpu_custom_call.1} parent=11 // pred_fallthru
          _
        // Predicated region
        $region41: #{tpu_custom_call.1} parent=11 // pred_check
          %p276 = pneg %p214
        $region42: #{tpu_custom_call.1} parent=11 // pred_check_branch
          %278 = sbr.rel (%p276) target = $region44
        $region43: #{tpu_custom_call.1} parent=11 // pred_region
          _
        $region44: #{tpu_custom_call.1} parent=11 // pred_fallthru
          _
      $region12: #{tpu_custom_call.1} parent=5 // pred_fallthru
        _
      %p279 = scmp.lt.s32.totalorder %s20, 4
      // Predicated region
      $region45: #{tpu_custom_call.1} parent=5 // pred_check
        %p280 = pneg %p279
      $region46: #{tpu_custom_call.1} parent=5 // pred_check_branch
        %282 = sbr.rel (%p280) target = $region48
      $region47: #{tpu_custom_call.1} parent=5 // pred_region
        // Predicated region
        $region49: #{tpu_custom_call.1} parent=47 // pred_check
          %p283 = pneg %p40
        $region50: #{tpu_custom_call.1} parent=47 // pred_check_branch
          %285 = sbr.rel (%p283) target = $region52
        $region51: #{tpu_custom_call.1} parent=47 // pred_region
          %s286 = smul.u32 2, %s20
          %p287 = scmp.lt.s32.totalorder %s286, 7
          %s288 = scalar_select %p287, %s286, 7
          %s289 = smul.addr %s288, 4
          %s290 = scalar_lea.vmem %s0, %s289
          %s291 = smul.u32 2, %s20
        $region52: #{tpu_custom_call.1} parent=47 // pred_fallthru
          _
      $region48: #{tpu_custom_call.1} parent=5 // pred_fallthru
        _
      %p292 = scmp.le.s32.totalorder 1, %s20
      %p293 = scmp.lt.s32.totalorder %s20, 5
      %p294 = pnand %p292, %p293
      %p295 = pneg %p294
      // Predicated region
      $region53: #{tpu_custom_call.1} parent=5 // pred_check
        _
      $region54: #{tpu_custom_call.1} parent=5 // pred_check_branch
        %297 = sbr.rel (%p294) target = $region56
      $region55: #{tpu_custom_call.1} parent=5 // pred_region
        %s298 = ssub.s32 %s20, 1
        %s299 = smul.u32 2, %s25
        %p300 = scmp.lt.s32.totalorder %s299, 7
        %s301 = scalar_select %p300, %s299, 7
        %s302 = smul.addr %s301, 4
        %s303 = scalar_lea.vmem %s0, %s302
        %p304 = pneg %p46
        %p305 = pneg %p43
        %p306 = pneg %p67
        %p307 = pneg %p64
        %p308 = pneg %p88
        %p309 = pneg %p85
        %p310 = pneg %p109
        %p311 = pneg %p106
        %p312 = pneg %p130
        %p313 = pneg %p127
        %p314 = pneg %p151
        %p315 = pneg %p148
        %p316 = pneg %p172
        %p317 = pneg %p169
        %p318 = pneg %p193
        %p319 = pneg %p190
        %p320 = pneg %p214
        %p321 = pneg %p211
        %p322 = pneg %p240
        %p323 = pneg %p237
        %s324 = sand.u32 %s227, 1
        %s325 = scalar_lea.sflag [#allocation4], %s324
        %s326 = sand.u32 %s227, 1
        %s327 = smul.addr %s326, 2
        %s328 = scalar_lea.vmem [#allocation3], %s327
        %s329 = smul.u32 2, %s25
        %p330 = scmp.lt.s32.totalorder %s329, 7
        %s331 = scalar_select %p330, %s329, 7
        %s332 = smul.addr %s331, 4
        %s333 = scalar_lea.vmem %s0, %s332
        %s334 = smul.u32 2, %s25
        %s335 = smul.u32 2, %s25
        %v336 = vld [vmem:[%s333] sm:$0x77]
        %v337 = vld [vmem:[%s1] sm:$0xff]
        %v338 = vld [vmem:[%s1 + $0x8] sm:$0xff]
        %v339 = vld [vmem:[%s1 + $0x10] sm:$0xff]
        %v340 = vld [vmem:[%s1 + $0x18] sm:$0xff]
        %v341 = vld [vmem:[%s1 + $0x20] sm:$0xff]
        %v342 = vld [vmem:[%s1 + $0x28] sm:$0xff]
        %v343 = vld [vmem:[%s1 + $0x30] sm:$0xff]
        %v344 = vld [vmem:[%s1 + $0x38] sm:$0xff]
        %v345 = vld [vmem:[%s2] sm:$0xff]
        %v346 = vld [vmem:[%s2 + $0x8] sm:$0xff]
        %v347 = vld [vmem:[%s2 + $0x10] sm:$0xff]
        %v348 = vld [vmem:[%s2 + $0x18] sm:$0xff]
        %v349 = vld [vmem:[%s2 + $0x20] sm:$0xff]
        %v350 = vld [vmem:[%s2 + $0x28] sm:$0xff]
        %v351 = vld [vmem:[%s2 + $0x30] sm:$0xff]
        %v352 = vld [vmem:[%s2 + $0x38] sm:$0xff]
        %354 = vset.pattern.permute.xlu0 0
        %355 = vperm.xlu0 %354, %v345
        %v356 = vpop.permute.xlu0 %355
        %359 = vset.pattern.permute.xlu0 0
        %360 = vperm.xlu0 %359, %v346
        %v361 = vpop.permute.xlu0 %360
        %364 = vset.pattern.permute.xlu0 0
        %365 = vperm.xlu0 %364, %v347
        %v366 = vpop.permute.xlu0 %365
        %369 = vset.pattern.permute.xlu0 0
        %370 = vperm.xlu0 %369, %v348
        %v371 = vpop.permute.xlu0 %370
        %374 = vset.pattern.permute.xlu0 0
        %375 = vperm.xlu0 %374, %v349
        %v376 = vpop.permute.xlu0 %375
        %379 = vset.pattern.permute.xlu0 0
        %380 = vperm.xlu0 %379, %v350
        %v381 = vpop.permute.xlu0 %380
        %384 = vset.pattern.permute.xlu0 0
        %385 = vperm.xlu0 %384, %v351
        %v386 = vpop.permute.xlu0 %385
        %389 = vset.pattern.permute.xlu0 0
        %390 = vperm.xlu0 %389, %v352
        %v391 = vpop.permute.xlu0 %390
        %394 = vst [vmem:[#allocation1] ss:$2 sm:$0xff] %v336
        %v395 = vld.sshfl [vmem:[#allocation1] sm:$0xff pattern:$0x75316420]
        %v396 = vld.sshfl [vmem:[#allocation1 + $0x8] sm:$0xff pattern:$0x75316420]
        %vm397 = vcmask 23552
        %v399 = vsel %vm397, %v337, 0
        %v402 = vsel %vm397, %v338, 0
        %v405 = vsel %vm397, %v339, 0
        %v408 = vsel %vm397, %v340, 0
        %v411 = vsel %vm397, %v341, 0
        %v414 = vsel %vm397, %v342, 0
        %v417 = vsel %vm397, %v343, 0
        %v420 = vsel %vm397, %v344, 0
        %vm422 = vcmask 1042432
        %v423 = vsel %vm422, %v395, 0
        %v425 = vsel %vm422, %v396, 0
        %427 = vmatpush.msra.mxu0 0.0
        %428 = vmatpush.msra.mxu0 0.0
        %429 = vmatpush.msra.mxu0 0.0
        %430 = vmatpush.msra.mxu0 0.0
        %431 = vmatpush.msra.mxu0 0.0
        %432 = vmatpush.msra.mxu0 0.0
        %433 = vmatpush.msra.mxu0 0.0
        %434 = vmatpush.msra.mxu0 0.0
        %435 = vmatpush.msra.mxu0 0.0
        %436 = vmatpush.msra.mxu0 0.0
        %437 = vmatpush.msra.mxu0 0.0
        %438 = vmatpush.msra.mxu0 0.0
        %439 = vmatpush.msra.mxu0 0.0
        %440 = vmatpush.msra.mxu0 0.0
        %441 = vmatpush.msra.mxu0 0.0
        %442 = vmatpush.msra.mxu0 %v423
        %443 = vmatmul.f32.gmra.mxu0 %v399
        %v444 = vpop.f32.mrf.mxu0
        %v445 = vadd.f32 %v356, %v444
        %446 = vmatmul.f32.gmra.mxu0 %v402
        %v447 = vpop.f32.mrf.mxu0
        %v448 = vadd.f32 %v361, %v447
        %449 = vmatmul.f32.gmra.mxu0 %v405
        %v450 = vpop.f32.mrf.mxu0
        %v451 = vadd.f32 %v366, %v450
        %452 = vmatmul.f32.gmra.mxu0 %v408
        %v453 = vpop.f32.mrf.mxu0
        %v454 = vadd.f32 %v371, %v453
        %455 = vmatmul.f32.gmra.mxu0 %v411
        %v456 = vpop.f32.mrf.mxu0
        %v457 = vadd.f32 %v376, %v456
        %458 = vmatmul.f32.gmra.mxu0 %v414
        %v459 = vpop.f32.mrf.mxu0
        %v460 = vadd.f32 %v381, %v459
        %461 = vmatmul.f32.gmra.mxu0 %v417
        %v462 = vpop.f32.mrf.mxu0
        %v463 = vadd.f32 %v386, %v462
        %464 = vmatmul.f32.gmra.mxu0 %v420
        %v465 = vpop.f32.mrf.mxu0
        %v466 = vadd.f32 %v391, %v465
        %467 = vdwg.mxu0
        %468 = vmatpush.msra.mxu0 0.0
        %469 = vmatpush.msra.mxu0 0.0
        %470 = vmatpush.msra.mxu0 0.0
        %471 = vmatpush.msra.mxu0 0.0
        %472 = vmatpush.msra.mxu0 0.0
        %473 = vmatpush.msra.mxu0 0.0
        %474 = vmatpush.msra.mxu0 0.0
        %475 = vmatpush.msra.mxu0 0.0
        %476 = vmatpush.msra.mxu0 0.0
        %477 = vmatpush.msra.mxu0 0.0
        %478 = vmatpush.msra.mxu0 0.0
        %479 = vmatpush.msra.mxu0 0.0
        %480 = vmatpush.msra.mxu0 0.0
        %481 = vmatpush.msra.mxu0 0.0
        %482 = vmatpush.msra.mxu0 0.0
        %483 = vmatpush.msra.mxu0 %v425
        %484 = vmatmul.f32.gmra.mxu0 %v399
        %v485 = vpop.f32.mrf.mxu0
        %v486 = vadd.f32 %v356, %v485
        %487 = vmatmul.f32.gmra.mxu0 %v402
        %v488 = vpop.f32.mrf.mxu0
        %v489 = vadd.f32 %v361, %v488
        %490 = vmatmul.f32.gmra.mxu0 %v405
        %v491 = vpop.f32.mrf.mxu0
        %v492 = vadd.f32 %v366, %v491
        %493 = vmatmul.f32.gmra.mxu0 %v408
        %v494 = vpop.f32.mrf.mxu0
        %v495 = vadd.f32 %v371, %v494
        %496 = vmatmul.f32.gmra.mxu0 %v411
        %v497 = vpop.f32.mrf.mxu0
        %v498 = vadd.f32 %v376, %v497
        %499 = vmatmul.f32.gmra.mxu0 %v414
        %v500 = vpop.f32.mrf.mxu0
        %v501 = vadd.f32 %v381, %v500
        %502 = vmatmul.f32.gmra.mxu0 %v417
        %v503 = vpop.f32.mrf.mxu0
        %v504 = vadd.f32 %v386, %v503
        %505 = vmatmul.f32.gmra.mxu0 %v420
        %v506 = vpop.f32.mrf.mxu0
        %v507 = vadd.f32 %v391, %v506
        %508 = vdwg.mxu0
        %v509 = vtanh.pop %v445
        %v510 = vtanh.pop %v486
        %v511 = vtanh.pop %v448
        %v512 = vtanh.pop %v489
        %v513 = vtanh.pop %v451
        %v514 = vtanh.pop %v492
        %v515 = vtanh.pop %v454
        %v516 = vtanh.pop %v495
        %v517 = vtanh.pop %v457
        %v518 = vtanh.pop %v498
        %v519 = vtanh.pop %v460
        %v520 = vtanh.pop %v501
        %v521 = vtanh.pop %v463
        %v522 = vtanh.pop %v504
        %v523 = vtanh.pop %v466
        %v524 = vtanh.pop %v507
        %v525 = vld [vmem:[%s3] sm:$0xff]
        %v526 = vld [vmem:[%s3 + $0x8] sm:$0xff]
        %v527 = vld [vmem:[%s3 + $0x10] sm:$0xff]
        %v528 = vld [vmem:[%s3 + $0x18] sm:$0xff]
        %v529 = vld [vmem:[%s3 + $0x20] sm:$0xff]
        %v530 = vld [vmem:[%s3 + $0x28] sm:$0xff]
        %v531 = vld [vmem:[%s3 + $0x30] sm:$0xff]
        %v532 = vld [vmem:[%s3 + $0x38] sm:$0xff]
        %v533 = vld [vmem:[%s3 + $0x40] sm:$0xff]
        %v534 = vld [vmem:[%s3 + $0x48] sm:$0xff]
        %v535 = vld [vmem:[%s3 + $0x50] sm:$0xff]
        %v536 = vld [vmem:[%s3 + $0x58] sm:$0xff]
        %v537 = vld [vmem:[%s3 + $0x60] sm:$0xff]
        %v538 = vld [vmem:[%s3 + $0x68] sm:$0xff]
        %v539 = vld [vmem:[%s3 + $0x70] sm:$0xff]
        %v540 = vld [vmem:[%s3 + $0x78] sm:$0xff]
        %v541 = vld [vmem:[%s4] sm:$0xff]
        %v542 = vld [vmem:[%s4 + $0x8] sm:$0xff]
        %v543 = vld [vmem:[%s4 + $0x10] sm:$0xff]
        %v544 = vld [vmem:[%s4 + $0x18] sm:$0xff]
        %v545 = vld [vmem:[%s4 + $0x20] sm:$0xff]
        %v546 = vld [vmem:[%s4 + $0x28] sm:$0xff]
        %v547 = vld [vmem:[%s4 + $0x30] sm:$0xff]
        %v548 = vld [vmem:[%s4 + $0x38] sm:$0xff]
        %v549 = vld [vmem:[%s4 + $0x40] sm:$0xff]
        %v550 = vld [vmem:[%s4 + $0x48] sm:$0xff]
        %v551 = vld [vmem:[%s4 + $0x50] sm:$0xff]
        %v552 = vld [vmem:[%s4 + $0x58] sm:$0xff]
        %v553 = vld [vmem:[%s4 + $0x60] sm:$0xff]
        %v554 = vld [vmem:[%s4 + $0x68] sm:$0xff]
        %v555 = vld [vmem:[%s4 + $0x70] sm:$0xff]
        %v556 = vld [vmem:[%s4 + $0x78] sm:$0xff]
        %558 = vset.pattern.permute.xlu0 0
        %559 = vperm.xlu0 %558, %v541
        %v560 = vpop.permute.xlu0 %559
        %563 = vset.pattern.permute.xlu0 0
        %564 = vperm.xlu0 %563, %v542
        %v565 = vpop.permute.xlu0 %564
        %568 = vset.pattern.permute.xlu0 0
        %569 = vperm.xlu0 %568, %v543
        %v570 = vpop.permute.xlu0 %569
        %573 = vset.pattern.permute.xlu0 0
        %574 = vperm.xlu0 %573, %v544
        %v575 = vpop.permute.xlu0 %574
        %578 = vset.pattern.permute.xlu0 0
        %579 = vperm.xlu0 %578, %v545
        %v580 = vpop.permute.xlu0 %579
        %583 = vset.pattern.permute.xlu0 0
        %584 = vperm.xlu0 %583, %v546
        %v585 = vpop.permute.xlu0 %584
        %588 = vset.pattern.permute.xlu0 0
        %589 = vperm.xlu0 %588, %v547
        %v590 = vpop.permute.xlu0 %589
        %593 = vset.pattern.permute.xlu0 0
        %594 = vperm.xlu0 %593, %v548
        %v595 = vpop.permute.xlu0 %594
        %598 = vset.pattern.permute.xlu0 0
        %599 = vperm.xlu0 %598, %v549
        %v600 = vpop.permute.xlu0 %599
        %603 = vset.pattern.permute.xlu0 0
        %604 = vperm.xlu0 %603, %v550
        %v605 = vpop.permute.xlu0 %604
        %608 = vset.pattern.permute.xlu0 0
        %609 = vperm.xlu0 %608, %v551
        %v610 = vpop.permute.xlu0 %609
        %613 = vset.pattern.permute.xlu0 0
        %614 = vperm.xlu0 %613, %v552
        %v615 = vpop.permute.xlu0 %614
        %618 = vset.pattern.permute.xlu0 0
        %619 = vperm.xlu0 %618, %v553
        %v620 = vpop.permute.xlu0 %619
        %623 = vset.pattern.permute.xlu0 0
        %624 = vperm.xlu0 %623, %v554
        %v625 = vpop.permute.xlu0 %624
        %628 = vset.pattern.permute.xlu0 0
        %629 = vperm.xlu0 %628, %v555
        %v630 = vpop.permute.xlu0 %629
        %633 = vset.pattern.permute.xlu0 0
        %634 = vperm.xlu0 %633, %v556
        %v635 = vpop.permute.xlu0 %634
        %vm637 = vcmask 523264
        %v639 = vsel %vm637, %v525, 0
        %v642 = vsel %vm637, %v526, 0
        %v645 = vsel %vm637, %v527, 0
        %v648 = vsel %vm637, %v528, 0
        %v651 = vsel %vm637, %v529, 0
        %v654 = vsel %vm637, %v530, 0
        %v657 = vsel %vm637, %v531, 0
        %v660 = vsel %vm637, %v532, 0
        %v663 = vsel %vm637, %v533, 0
        %v666 = vsel %vm637, %v534, 0
        %v669 = vsel %vm637, %v535, 0
        %v672 = vsel %vm637, %v536, 0
        %v675 = vsel %vm637, %v537, 0
        %v678 = vsel %vm637, %v538, 0
        %v681 = vsel %vm637, %v539, 0
        %v684 = vsel %vm637, %v540, 0
        %686 = vmatpush.msra.mxu0 0.0
        %687 = vmatpush.msra.mxu0 0.0
        %688 = vmatpush.msra.mxu0 0.0
        %689 = vmatpush.msra.mxu0 0.0
        %690 = vmatpush.msra.mxu0 0.0
        %691 = vmatpush.msra.mxu0 0.0
        %692 = vmatpush.msra.mxu0 0.0
        %693 = vmatpush.msra.mxu0 0.0
        %694 = vmatpush.msra.mxu0 %v523
        %695 = vmatpush.msra.mxu0 %v521
        %696 = vmatpush.msra.mxu0 %v519
        %697 = vmatpush.msra.mxu0 %v517
        %698 = vmatpush.msra.mxu0 %v515
        %699 = vmatpush.msra.mxu0 %v513
        %700 = vmatpush.msra.mxu0 %v511
        %701 = vmatpush.msra.mxu0 %v509
        %702 = vmatmul.f32.gmra.mxu0 %v639
        %v703 = vpop.f32.mrf.mxu0
        %v704 = vadd.f32 %v560, %v703
        %705 = vmatmul.f32.gmra.mxu0 %v642
        %v706 = vpop.f32.mrf.mxu0
        %v707 = vadd.f32 %v565, %v706
        %708 = vmatmul.f32.gmra.mxu0 %v645
        %v709 = vpop.f32.mrf.mxu0
        %v710 = vadd.f32 %v570, %v709
        %711 = vmatmul.f32.gmra.mxu0 %v648
        %v712 = vpop.f32.mrf.mxu0
        %v713 = vadd.f32 %v575, %v712
        %714 = vmatmul.f32.gmra.mxu0 %v651
        %v715 = vpop.f32.mrf.mxu0
        %v716 = vadd.f32 %v580, %v715
        %717 = vmatmul.f32.gmra.mxu0 %v654
        %v718 = vpop.f32.mrf.mxu0
        %v719 = vadd.f32 %v585, %v718
        %720 = vmatmul.f32.gmra.mxu0 %v657
        %v721 = vpop.f32.mrf.mxu0
        %v722 = vadd.f32 %v590, %v721
        %723 = vmatmul.f32.gmra.mxu0 %v660
        %v724 = vpop.f32.mrf.mxu0
        %v725 = vadd.f32 %v595, %v724
        %726 = vmatmul.f32.gmra.mxu0 %v663
        %v727 = vpop.f32.mrf.mxu0
        %v728 = vadd.f32 %v600, %v727
        %729 = vmatmul.f32.gmra.mxu0 %v666
        %v730 = vpop.f32.mrf.mxu0
        %v731 = vadd.f32 %v605, %v730
        %732 = vmatmul.f32.gmra.mxu0 %v669
        %v733 = vpop.f32.mrf.mxu0
        %v734 = vadd.f32 %v610, %v733
        %735 = vmatmul.f32.gmra.mxu0 %v672
        %v736 = vpop.f32.mrf.mxu0
        %v737 = vadd.f32 %v615, %v736
        %738 = vmatmul.f32.gmra.mxu0 %v675
        %v739 = vpop.f32.mrf.mxu0
        %v740 = vadd.f32 %v620, %v739
        %741 = vmatmul.f32.gmra.mxu0 %v678
        %v742 = vpop.f32.mrf.mxu0
        %v743 = vadd.f32 %v625, %v742
        %744 = vmatmul.f32.gmra.mxu0 %v681
        %v745 = vpop.f32.mrf.mxu0
        %v746 = vadd.f32 %v630, %v745
        %747 = vmatmul.f32.gmra.mxu0 %v684
        %v748 = vpop.f32.mrf.mxu0
        %v749 = vadd.f32 %v635, %v748
        %750 = vdwg.mxu0
        %751 = vmatpush.msra.mxu0 0.0
        %752 = vmatpush.msra.mxu0 0.0
        %753 = vmatpush.msra.mxu0 0.0
        %754 = vmatpush.msra.mxu0 0.0
        %755 = vmatpush.msra.mxu0 0.0
        %756 = vmatpush.msra.mxu0 0.0
        %757 = vmatpush.msra.mxu0 0.0
        %758 = vmatpush.msra.mxu0 0.0
        %759 = vmatpush.msra.mxu0 %v524
        %760 = vmatpush.msra.mxu0 %v522
        %761 = vmatpush.msra.mxu0 %v520
        %762 = vmatpush.msra.mxu0 %v518
        %763 = vmatpush.msra.mxu0 %v516
        %764 = vmatpush.msra.mxu0 %v514
        %765 = vmatpush.msra.mxu0 %v512
        %766 = vmatpush.msra.mxu0 %v510
        %767 = vmatmul.f32.gmra.mxu0 %v639
        %v768 = vpop.f32.mrf.mxu0
        %v769 = vadd.f32 %v560, %v768
        %770 = vmatmul.f32.gmra.mxu0 %v642
        %v771 = vpop.f32.mrf.mxu0
        %v772 = vadd.f32 %v565, %v771
        %773 = vmatmul.f32.gmra.mxu0 %v645
        %v774 = vpop.f32.mrf.mxu0
        %v775 = vadd.f32 %v570, %v774
        %776 = vmatmul.f32.gmra.mxu0 %v648
        %v777 = vpop.f32.mrf.mxu0
        %v778 = vadd.f32 %v575, %v777
        %779 = vmatmul.f32.gmra.mxu0 %v651
        %v780 = vpop.f32.mrf.mxu0
        %v781 = vadd.f32 %v580, %v780
        %782 = vmatmul.f32.gmra.mxu0 %v654
        %v783 = vpop.f32.mrf.mxu0
        %v784 = vadd.f32 %v585, %v783
        %785 = vmatmul.f32.gmra.mxu0 %v657
        %v786 = vpop.f32.mrf.mxu0
        %v787 = vadd.f32 %v590, %v786
        %788 = vmatmul.f32.gmra.mxu0 %v660
        %v789 = vpop.f32.mrf.mxu0
        %v790 = vadd.f32 %v595, %v789
        %791 = vmatmul.f32.gmra.mxu0 %v663
        %v792 = vpop.f32.mrf.mxu0
        %v793 = vadd.f32 %v600, %v792
        %794 = vmatmul.f32.gmra.mxu0 %v666
        %v795 = vpop.f32.mrf.mxu0
        %v796 = vadd.f32 %v605, %v795
        %797 = vmatmul.f32.gmra.mxu0 %v669
        %v798 = vpop.f32.mrf.mxu0
        %v799 = vadd.f32 %v610, %v798
        %800 = vmatmul.f32.gmra.mxu0 %v672
        %v801 = vpop.f32.mrf.mxu0
        %v802 = vadd.f32 %v615, %v801
        %803 = vmatmul.f32.gmra.mxu0 %v675
        %v804 = vpop.f32.mrf.mxu0
        %v805 = vadd.f32 %v620, %v804
        %806 = vmatmul.f32.gmra.mxu0 %v678
        %v807 = vpop.f32.mrf.mxu0
        %v808 = vadd.f32 %v625, %v807
        %809 = vmatmul.f32.gmra.mxu0 %v681
        %v810 = vpop.f32.mrf.mxu0
        %v811 = vadd.f32 %v630, %v810
        %812 = vmatmul.f32.gmra.mxu0 %v684
        %v813 = vpop.f32.mrf.mxu0
        %v814 = vadd.f32 %v635, %v813
        %815 = vdwg.mxu0
        %v816 = vtanh.pop %v704
        %v817 = vtanh.pop %v769
        %v818 = vtanh.pop %v707
        %v819 = vtanh.pop %v772
        %v820 = vtanh.pop %v710
        %v821 = vtanh.pop %v775
        %v822 = vtanh.pop %v713
        %v823 = vtanh.pop %v778
        %v824 = vtanh.pop %v716
        %v825 = vtanh.pop %v781
        %v826 = vtanh.pop %v719
        %v827 = vtanh.pop %v784
        %v828 = vtanh.pop %v722
        %v829 = vtanh.pop %v787
        %v830 = vtanh.pop %v725
        %v831 = vtanh.pop %v790
        %v832 = vtanh.pop %v728
        %v833 = vtanh.pop %v793
        %v834 = vtanh.pop %v731
        %v835 = vtanh.pop %v796
        %v836 = vtanh.pop %v734
        %v837 = vtanh.pop %v799
        %v838 = vtanh.pop %v737
        %v839 = vtanh.pop %v802
        %v840 = vtanh.pop %v740
        %v841 = vtanh.pop %v805
        %v842 = vtanh.pop %v743
        %v843 = vtanh.pop %v808
        %v844 = vtanh.pop %v746
        %v845 = vtanh.pop %v811
        %v846 = vtanh.pop %v749
        %v847 = vtanh.pop %v814
        %v848 = vld [vmem:[%s5] sm:$0xff]
        %v849 = vld [vmem:[%s5 + $0x8] sm:$0xff]
        %v850 = vld [vmem:[%s5 + $0x10] sm:$0xff]
        %v851 = vld [vmem:[%s5 + $0x18] sm:$0xff]
        %v852 = vld [vmem:[%s5 + $0x20] sm:$0xff]
        %v853 = vld [vmem:[%s5 + $0x28] sm:$0xff]
        %v854 = vld [vmem:[%s5 + $0x30] sm:$0xff]
        %v855 = vld [vmem:[%s5 + $0x38] sm:$0xff]
        %v856 = vld [vmem:[%s6] sm:$0xff]
        %v857 = vld [vmem:[%s6 + $0x8] sm:$0xff]
        %v858 = vld [vmem:[%s6 + $0x10] sm:$0xff]
        %v859 = vld [vmem:[%s6 + $0x18] sm:$0xff]
        %v860 = vld [vmem:[%s6 + $0x20] sm:$0xff]
        %v861 = vld [vmem:[%s6 + $0x28] sm:$0xff]
        %v862 = vld [vmem:[%s6 + $0x30] sm:$0xff]
        %v863 = vld [vmem:[%s6 + $0x38] sm:$0xff]
        %865 = vset.pattern.permute.xlu0 0
        %866 = vperm.xlu0 %865, %v856
        %v867 = vpop.permute.xlu0 %866
        %870 = vset.pattern.permute.xlu0 0
        %871 = vperm.xlu0 %870, %v857
        %v872 = vpop.permute.xlu0 %871
        %875 = vset.pattern.permute.xlu0 0
        %876 = vperm.xlu0 %875, %v858
        %v877 = vpop.permute.xlu0 %876
        %880 = vset.pattern.permute.xlu0 0
        %881 = vperm.xlu0 %880, %v859
        %v882 = vpop.permute.xlu0 %881
        %885 = vset.pattern.permute.xlu0 0
        %886 = vperm.xlu0 %885, %v860
        %v887 = vpop.permute.xlu0 %886
        %890 = vset.pattern.permute.xlu0 0
        %891 = vperm.xlu0 %890, %v861
        %v892 = vpop.permute.xlu0 %891
        %895 = vset.pattern.permute.xlu0 0
        %896 = vperm.xlu0 %895, %v862
        %v897 = vpop.permute.xlu0 %896
        %900 = vset.pattern.permute.xlu0 0
        %901 = vperm.xlu0 %900, %v863
        %v902 = vpop.permute.xlu0 %901
        %904 = vmatpush.msra.mxu0 %v846
        %905 = vmatpush.msra.mxu0 %v844
        %906 = vmatpush.msra.mxu0 %v842
        %907 = vmatpush.msra.mxu0 %v840
        %908 = vmatpush.msra.mxu0 %v838
        %909 = vmatpush.msra.mxu0 %v836
        %910 = vmatpush.msra.mxu0 %v834
        %911 = vmatpush.msra.mxu0 %v832
        %912 = vmatpush.msra.mxu0 %v830
        %913 = vmatpush.msra.mxu0 %v828
        %914 = vmatpush.msra.mxu0 %v826
        %915 = vmatpush.msra.mxu0 %v824
        %916 = vmatpush.msra.mxu0 %v822
        %917 = vmatpush.msra.mxu0 %v820
        %918 = vmatpush.msra.mxu0 %v818
        %919 = vmatpush.msra.mxu0 %v816
        %920 = vmatmul.f32.gmra.mxu0 %v848
        %v921 = vpop.f32.mrf.mxu0
        %v922 = vadd.f32 %v867, %v921
        %923 = vmatmul.f32.gmra.mxu0 %v849
        %v924 = vpop.f32.mrf.mxu0
        %v925 = vadd.f32 %v872, %v924
        %926 = vmatmul.f32.gmra.mxu0 %v850
        %v927 = vpop.f32.mrf.mxu0
        %v928 = vadd.f32 %v877, %v927
        %929 = vmatmul.f32.gmra.mxu0 %v851
        %v930 = vpop.f32.mrf.mxu0
        %v931 = vadd.f32 %v882, %v930
        %932 = vmatmul.f32.gmra.mxu0 %v852
        %v933 = vpop.f32.mrf.mxu0
        %v934 = vadd.f32 %v887, %v933
        %935 = vmatmul.f32.gmra.mxu0 %v853
        %v936 = vpop.f32.mrf.mxu0
        %v937 = vadd.f32 %v892, %v936
        %938 = vmatmul.f32.gmra.mxu0 %v854
        %v939 = vpop.f32.mrf.mxu0
        %v940 = vadd.f32 %v897, %v939
        %941 = vmatmul.f32.gmra.mxu0 %v855
        %v942 = vpop.f32.mrf.mxu0
        %v943 = vadd.f32 %v902, %v942
        %944 = vdwg.mxu0
        %945 = vmatpush.msra.mxu0 %v847
        %946 = vmatpush.msra.mxu0 %v845
        %947 = vmatpush.msra.mxu0 %v843
        %948 = vmatpush.msra.mxu0 %v841
        %949 = vmatpush.msra.mxu0 %v839
        %950 = vmatpush.msra.mxu0 %v837
        %951 = vmatpush.msra.mxu0 %v835
        %952 = vmatpush.msra.mxu0 %v833
        %953 = vmatpush.msra.mxu0 %v831
        %954 = vmatpush.msra.mxu0 %v829
        %955 = vmatpush.msra.mxu0 %v827
        %956 = vmatpush.msra.mxu0 %v825
        %957 = vmatpush.msra.mxu0 %v823
        %958 = vmatpush.msra.mxu0 %v821
        %959 = vmatpush.msra.mxu0 %v819
        %960 = vmatpush.msra.mxu0 %v817
        %961 = vmatmul.f32.gmra.mxu0 %v848
        %v962 = vpop.f32.mrf.mxu0
        %v963 = vadd.f32 %v867, %v962
        %964 = vmatmul.f32.gmra.mxu0 %v849
        %v965 = vpop.f32.mrf.mxu0
        %v966 = vadd.f32 %v872, %v965
        %967 = vmatmul.f32.gmra.mxu0 %v850
        %v968 = vpop.f32.mrf.mxu0
        %v969 = vadd.f32 %v877, %v968
        %970 = vmatmul.f32.gmra.mxu0 %v851
        %v971 = vpop.f32.mrf.mxu0
        %v972 = vadd.f32 %v882, %v971
        %973 = vmatmul.f32.gmra.mxu0 %v852
        %v974 = vpop.f32.mrf.mxu0
        %v975 = vadd.f32 %v887, %v974
        %976 = vmatmul.f32.gmra.mxu0 %v853
        %v977 = vpop.f32.mrf.mxu0
        %v978 = vadd.f32 %v892, %v977
        %979 = vmatmul.f32.gmra.mxu0 %v854
        %v980 = vpop.f32.mrf.mxu0
        %v981 = vadd.f32 %v897, %v980
        %982 = vmatmul.f32.gmra.mxu0 %v855
        %v983 = vpop.f32.mrf.mxu0
        %v984 = vadd.f32 %v902, %v983
        %985 = vdwg.mxu0
        %v986 = vtanh.pop %v922
        %v987 = vtanh.pop %v963
        %v988 = vtanh.pop %v925
        %v989 = vtanh.pop %v966
        %v990 = vtanh.pop %v928
        %v991 = vtanh.pop %v969
        %v992 = vtanh.pop %v931
        %v993 = vtanh.pop %v972
        %v994 = vtanh.pop %v934
        %v995 = vtanh.pop %v975
        %v996 = vtanh.pop %v937
        %v997 = vtanh.pop %v978
        %v998 = vtanh.pop %v940
        %v999 = vtanh.pop %v981
        %v1000 = vtanh.pop %v943
        %v1001 = vtanh.pop %v984
        %v1002 = vadd.f32 %v509, %v986
        %v1003 = vadd.f32 %v510, %v987
        %v1004 = vadd.f32 %v511, %v988
        %v1005 = vadd.f32 %v512, %v989
        %v1006 = vadd.f32 %v513, %v990
        %v1007 = vadd.f32 %v514, %v991
        %v1008 = vadd.f32 %v515, %v992
        %v1009 = vadd.f32 %v516, %v993
        %v1010 = vadd.f32 %v517, %v994
        %v1011 = vadd.f32 %v518, %v995
        %v1012 = vadd.f32 %v519, %v996
        %v1013 = vadd.f32 %v520, %v997
        %v1014 = vadd.f32 %v521, %v998
        %v1015 = vadd.f32 %v522, %v999
        %v1016 = vadd.f32 %v523, %v1000
        %v1017 = vadd.f32 %v524, %v1001
        %s1018 = scalar_lea.vmem %s3, 128
        %v1019 = vld [vmem:[%s1018] sm:$0xff]
        %v1020 = vld [vmem:[%s1018 + $0x8] sm:$0xff]
        %v1021 = vld [vmem:[%s1018 + $0x10] sm:$0xff]
        %v1022 = vld [vmem:[%s1018 + $0x18] sm:$0xff]
        %v1023 = vld [vmem:[%s1018 + $0x20] sm:$0xff]
        %v1024 = vld [vmem:[%s1018 + $0x28] sm:$0xff]
        %v1025 = vld [vmem:[%s1018 + $0x30] sm:$0xff]
        %v1026 = vld [vmem:[%s1018 + $0x38] sm:$0xff]
        %v1027 = vld [vmem:[%s1018 + $0x40] sm:$0xff]
        %v1028 = vld [vmem:[%s1018 + $0x48] sm:$0xff]
        %v1029 = vld [vmem:[%s1018 + $0x50] sm:$0xff]
        %v1030 = vld [vmem:[%s1018 + $0x58] sm:$0xff]
        %v1031 = vld [vmem:[%s1018 + $0x60] sm:$0xff]
        %v1032 = vld [vmem:[%s1018 + $0x68] sm:$0xff]
        %v1033 = vld [vmem:[%s1018 + $0x70] sm:$0xff]
        %v1034 = vld [vmem:[%s1018 + $0x78] sm:$0xff]
        %s1035 = scalar_lea.vmem %s4, 128
        %v1036 = vld [vmem:[%s1035] sm:$0xff]
        %v1037 = vld [vmem:[%s1035 + $0x8] sm:$0xff]
        %v1038 = vld [vmem:[%s1035 + $0x10] sm:$0xff]
        %v1039 = vld [vmem:[%s1035 + $0x18] sm:$0xff]
        %v1040 = vld [vmem:[%s1035 + $0x20] sm:$0xff]
        %v1041 = vld [vmem:[%s1035 + $0x28] sm:$0xff]
        %v1042 = vld [vmem:[%s1035 + $0x30] sm:$0xff]
        %v1043 = vld [vmem:[%s1035 + $0x38] sm:$0xff]
        %v1044 = vld [vmem:[%s1035 + $0x40] sm:$0xff]
        %v1045 = vld [vmem:[%s1035 + $0x48] sm:$0xff]
        %v1046 = vld [vmem:[%s1035 + $0x50] sm:$0xff]
        %v1047 = vld [vmem:[%s1035 + $0x58] sm:$0xff]
        %v1048 = vld [vmem:[%s1035 + $0x60] sm:$0xff]
        %v1049 = vld [vmem:[%s1035 + $0x68] sm:$0xff]
        %v1050 = vld [vmem:[%s1035 + $0x70] sm:$0xff]
        %v1051 = vld [vmem:[%s1035 + $0x78] sm:$0xff]
        %1053 = vset.pattern.permute.xlu0 0
        %1054 = vperm.xlu0 %1053, %v1036
        %v1055 = vpop.permute.xlu0 %1054
        %1058 = vset.pattern.permute.xlu0 0
        %1059 = vperm.xlu0 %1058, %v1037
        %v1060 = vpop.permute.xlu0 %1059
        %1063 = vset.pattern.permute.xlu0 0
        %1064 = vperm.xlu0 %1063, %v1038
        %v1065 = vpop.permute.xlu0 %1064
        %1068 = vset.pattern.permute.xlu0 0
        %1069 = vperm.xlu0 %1068, %v1039
        %v1070 = vpop.permute.xlu0 %1069
        %1073 = vset.pattern.permute.xlu0 0
        %1074 = vperm.xlu0 %1073, %v1040
        %v1075 = vpop.permute.xlu0 %1074
        %1078 = vset.pattern.permute.xlu0 0
        %1079 = vperm.xlu0 %1078, %v1041
        %v1080 = vpop.permute.xlu0 %1079
        %1083 = vset.pattern.permute.xlu0 0
        %1084 = vperm.xlu0 %1083, %v1042
        %v1085 = vpop.permute.xlu0 %1084
        %1088 = vset.pattern.permute.xlu0 0
        %1089 = vperm.xlu0 %1088, %v1043
        %v1090 = vpop.permute.xlu0 %1089
        %1093 = vset.pattern.permute.xlu0 0
        %1094 = vperm.xlu0 %1093, %v1044
        %v1095 = vpop.permute.xlu0 %1094
        %1098 = vset.pattern.permute.xlu0 0
        %1099 = vperm.xlu0 %1098, %v1045
        %v1100 = vpop.permute.xlu0 %1099
        %1103 = vset.pattern.permute.xlu0 0
        %1104 = vperm.xlu0 %1103, %v1046
        %v1105 = vpop.permute.xlu0 %1104
        %1108 = vset.pattern.permute.xlu0 0
        %1109 = vperm.xlu0 %1108, %v1047
        %v1110 = vpop.permute.xlu0 %1109
        %1113 = vset.pattern.permute.xlu0 0
        %1114 = vperm.xlu0 %1113, %v1048
        %v1115 = vpop.permute.xlu0 %1114
        %1118 = vset.pattern.permute.xlu0 0
        %1119 = vperm.xlu0 %1118, %v1049
        %v1120 = vpop.permute.xlu0 %1119
        %1123 = vset.pattern.permute.xlu0 0
        %1124 = vperm.xlu0 %1123, %v1050
        %v1125 = vpop.permute.xlu0 %1124
        %1128 = vset.pattern.permute.xlu0 0
        %1129 = vperm.xlu0 %1128, %v1051
        %v1130 = vpop.permute.xlu0 %1129
        %v1133 = vsel %vm637, %v1019, 0
        %v1136 = vsel %vm637, %v1020, 0
        %v1139 = vsel %vm637, %v1021, 0
        %v1142 = vsel %vm637, %v1022, 0
        %v1145 = vsel %vm637, %v1023, 0
        %v1148 = vsel %vm637, %v1024, 0
        %v1151 = vsel %vm637, %v1025, 0
        %v1154 = vsel %vm637, %v1026, 0
        %v1157 = vsel %vm637, %v1027, 0
        %v1160 = vsel %vm637, %v1028, 0
        %v1163 = vsel %vm637, %v1029, 0
        %v1166 = vsel %vm637, %v1030, 0
        %v1169 = vsel %vm637, %v1031, 0
        %v1172 = vsel %vm637, %v1032, 0
        %v1175 = vsel %vm637, %v1033, 0
        %v1178 = vsel %vm637, %v1034, 0
        %1180 = vmatpush.msra.mxu0 0.0
        %1181 = vmatpush.msra.mxu0 0.0
        %1182 = vmatpush.msra.mxu0 0.0
        %1183 = vmatpush.msra.mxu0 0.0
        %1184 = vmatpush.msra.mxu0 0.0
        %1185 = vmatpush.msra.mxu0 0.0
        %1186 = vmatpush.msra.mxu0 0.0
        %1187 = vmatpush.msra.mxu0 0.0
        %1188 = vmatpush.msra.mxu0 %v1016
        %1189 = vmatpush.msra.mxu0 %v1014
        %1190 = vmatpush.msra.mxu0 %v1012
        %1191 = vmatpush.msra.mxu0 %v1010
        %1192 = vmatpush.msra.mxu0 %v1008
        %1193 = vmatpush.msra.mxu0 %v1006
        %1194 = vmatpush.msra.mxu0 %v1004
        %1195 = vmatpush.msra.mxu0 %v1002
        %1196 = vmatmul.f32.gmra.mxu0 %v1133
        %v1197 = vpop.f32.mrf.mxu0
        %v1198 = vadd.f32 %v1055, %v1197
        %1199 = vmatmul.f32.gmra.mxu0 %v1136
        %v1200 = vpop.f32.mrf.mxu0
        %v1201 = vadd.f32 %v1060, %v1200
        %1202 = vmatmul.f32.gmra.mxu0 %v1139
        %v1203 = vpop.f32.mrf.mxu0
        %v1204 = vadd.f32 %v1065, %v1203
        %1205 = vmatmul.f32.gmra.mxu0 %v1142
        %v1206 = vpop.f32.mrf.mxu0
        %v1207 = vadd.f32 %v1070, %v1206
        %1208 = vmatmul.f32.gmra.mxu0 %v1145
        %v1209 = vpop.f32.mrf.mxu0
        %v1210 = vadd.f32 %v1075, %v1209
        %1211 = vmatmul.f32.gmra.mxu0 %v1148
        %v1212 = vpop.f32.mrf.mxu0
        %v1213 = vadd.f32 %v1080, %v1212
        %1214 = vmatmul.f32.gmra.mxu0 %v1151
        %v1215 = vpop.f32.mrf.mxu0
        %v1216 = vadd.f32 %v1085, %v1215
        %1217 = vmatmul.f32.gmra.mxu0 %v1154
        %v1218 = vpop.f32.mrf.mxu0
        %v1219 = vadd.f32 %v1090, %v1218
        %1220 = vmatmul.f32.gmra.mxu0 %v1157
        %v1221 = vpop.f32.mrf.mxu0
        %v1222 = vadd.f32 %v1095, %v1221
        %1223 = vmatmul.f32.gmra.mxu0 %v1160
        %v1224 = vpop.f32.mrf.mxu0
        %v1225 = vadd.f32 %v1100, %v1224
        %1226 = vmatmul.f32.gmra.mxu0 %v1163
        %v1227 = vpop.f32.mrf.mxu0
        %v1228 = vadd.f32 %v1105, %v1227
        %1229 = vmatmul.f32.gmra.mxu0 %v1166
        %v1230 = vpop.f32.mrf.mxu0
        %v1231 = vadd.f32 %v1110, %v1230
        %1232 = vmatmul.f32.gmra.mxu0 %v1169
        %v1233 = vpop.f32.mrf.mxu0
        %v1234 = vadd.f32 %v1115, %v1233
        %1235 = vmatmul.f32.gmra.mxu0 %v1172
        %v1236 = vpop.f32.mrf.mxu0
        %v1237 = vadd.f32 %v1120, %v1236
        %1238 = vmatmul.f32.gmra.mxu0 %v1175
        %v1239 = vpop.f32.mrf.mxu0
        %v1240 = vadd.f32 %v1125, %v1239
        %1241 = vmatmul.f32.gmra.mxu0 %v1178
        %v1242 = vpop.f32.mrf.mxu0
        %v1243 = vadd.f32 %v1130, %v1242
        %1244 = vdwg.mxu0
        %1245 = vmatpush.msra.mxu0 0.0
        %1246 = vmatpush.msra.mxu0 0.0
        %1247 = vmatpush.msra.mxu0 0.0
        %1248 = vmatpush.msra.mxu0 0.0
        %1249 = vmatpush.msra.mxu0 0.0
        %1250 = vmatpush.msra.mxu0 0.0
        %1251 = vmatpush.msra.mxu0 0.0
        %1252 = vmatpush.msra.mxu0 0.0
        %1253 = vmatpush.msra.mxu0 %v1017
        %1254 = vmatpush.msra.mxu0 %v1015
        %1255 = vmatpush.msra.mxu0 %v1013
        %1256 = vmatpush.msra.mxu0 %v1011
        %1257 = vmatpush.msra.mxu0 %v1009
        %1258 = vmatpush.msra.mxu0 %v1007
        %1259 = vmatpush.msra.mxu0 %v1005
        %1260 = vmatpush.msra.mxu0 %v1003
        %1261 = vmatmul.f32.gmra.mxu0 %v1133
        %v1262 = vpop.f32.mrf.mxu0
        %v1263 = vadd.f32 %v1055, %v1262
        %1264 = vmatmul.f32.gmra.mxu0 %v1136
        %v1265 = vpop.f32.mrf.mxu0
        %v1266 = vadd.f32 %v1060, %v1265
        %1267 = vmatmul.f32.gmra.mxu0 %v1139
        %v1268 = vpop.f32.mrf.mxu0
        %v1269 = vadd.f32 %v1065, %v1268
        %1270 = vmatmul.f32.gmra.mxu0 %v1142
        %v1271 = vpop.f32.mrf.mxu0
        %v1272 = vadd.f32 %v1070, %v1271
        %1273 = vmatmul.f32.gmra.mxu0 %v1145
        %v1274 = vpop.f32.mrf.mxu0
        %v1275 = vadd.f32 %v1075, %v1274
        %1276 = vmatmul.f32.gmra.mxu0 %v1148
        %v1277 = vpop.f32.mrf.mxu0
        %v1278 = vadd.f32 %v1080, %v1277
        %1279 = vmatmul.f32.gmra.mxu0 %v1151
        %v1280 = vpop.f32.mrf.mxu0
        %v1281 = vadd.f32 %v1085, %v1280
        %1282 = vmatmul.f32.gmra.mxu0 %v1154
        %v1283 = vpop.f32.mrf.mxu0
        %v1284 = vadd.f32 %v1090, %v1283
        %1285 = vmatmul.f32.gmra.mxu0 %v1157
        %v1286 = vpop.f32.mrf.mxu0
        %v1287 = vadd.f32 %v1095, %v1286
        %1288 = vmatmul.f32.gmra.mxu0 %v1160
        %v1289 = vpop.f32.mrf.mxu0
        %v1290 = vadd.f32 %v1100, %v1289
        %1291 = vmatmul.f32.gmra.mxu0 %v1163
        %v1292 = vpop.f32.mrf.mxu0
        %v1293 = vadd.f32 %v1105, %v1292
        %1294 = vmatmul.f32.gmra.mxu0 %v1166
        %v1295 = vpop.f32.mrf.mxu0
        %v1296 = vadd.f32 %v1110, %v1295
        %1297 = vmatmul.f32.gmra.mxu0 %v1169
        %v1298 = vpop.f32.mrf.mxu0
        %v1299 = vadd.f32 %v1115, %v1298
        %1300 = vmatmul.f32.gmra.mxu0 %v1172
        %v1301 = vpop.f32.mrf.mxu0
        %v1302 = vadd.f32 %v1120, %v1301
        %1303 = vmatmul.f32.gmra.mxu0 %v1175
        %v1304 = vpop.f32.mrf.mxu0
        %v1305 = vadd.f32 %v1125, %v1304
        %1306 = vmatmul.f32.gmra.mxu0 %v1178
        %v1307 = vpop.f32.mrf.mxu0
        %v1308 = vadd.f32 %v1130, %v1307
        %1309 = vdwg.mxu0
        %v1310 = vtanh.pop %v1198
        %v1311 = vtanh.pop %v1263
        %v1312 = vtanh.pop %v1201
        %v1313 = vtanh.pop %v1266
        %v1314 = vtanh.pop %v1204
        %v1315 = vtanh.pop %v1269
        %v1316 = vtanh.pop %v1207
        %v1317 = vtanh.pop %v1272
        %v1318 = vtanh.pop %v1210
        %v1319 = vtanh.pop %v1275
        %v1320 = vtanh.pop %v1213
        %v1321 = vtanh.pop %v1278
        %v1322 = vtanh.pop %v1216
        %v1323 = vtanh.pop %v1281
        %v1324 = vtanh.pop %v1219
        %v1325 = vtanh.pop %v1284
        %v1326 = vtanh.pop %v1222
        %v1327 = vtanh.pop %v1287
        %v1328 = vtanh.pop %v1225
        %v1329 = vtanh.pop %v1290
        %v1330 = vtanh.pop %v1228
        %v1331 = vtanh.pop %v1293
        %v1332 = vtanh.pop %v1231
        %v1333 = vtanh.pop %v1296
        %v1334 = vtanh.pop %v1234
        %v1335 = vtanh.pop %v1299
        %v1336 = vtanh.pop %v1237
        %v1337 = vtanh.pop %v1302
        %v1338 = vtanh.pop %v1240
        %v1339 = vtanh.pop %v1305
        %v1340 = vtanh.pop %v1243
        %v1341 = vtanh.pop %v1308
        %s1342 = scalar_lea.vmem %s5, 64
        %v1343 = vld [vmem:[%s1342] sm:$0xff]
        %v1344 = vld [vmem:[%s1342 + $0x8] sm:$0xff]
        %v1345 = vld [vmem:[%s1342 + $0x10] sm:$0xff]
        %v1346 = vld [vmem:[%s1342 + $0x18] sm:$0xff]
        %v1347 = vld [vmem:[%s1342 + $0x20] sm:$0xff]
        %v1348 = vld [vmem:[%s1342 + $0x28] sm:$0xff]
        %v1349 = vld [vmem:[%s1342 + $0x30] sm:$0xff]
        %v1350 = vld [vmem:[%s1342 + $0x38] sm:$0xff]
        %s1351 = scalar_lea.vmem %s6, 64
        %v1352 = vld [vmem:[%s1351] sm:$0xff]
        %v1353 = vld [vmem:[%s1351 + $0x8] sm:$0xff]
        %v1354 = vld [vmem:[%s1351 + $0x10] sm:$0xff]
        %v1355 = vld [vmem:[%s1351 + $0x18] sm:$0xff]
        %v1356 = vld [vmem:[%s1351 + $0x20] sm:$0xff]
        %v1357 = vld [vmem:[%s1351 + $0x28] sm:$0xff]
        %v1358 = vld [vmem:[%s1351 + $0x30] sm:$0xff]
        %v1359 = vld [vmem:[%s1351 + $0x38] sm:$0xff]
        %1361 = vset.pattern.permute.xlu0 0
        %1362 = vperm.xlu0 %1361, %v1352
        %v1363 = vpop.permute.xlu0 %1362
        %1366 = vset.pattern.permute.xlu0 0
        %1367 = vperm.xlu0 %1366, %v1353
        %v1368 = vpop.permute.xlu0 %1367
        %1371 = vset.pattern.permute.xlu0 0
        %1372 = vperm.xlu0 %1371, %v1354
        %v1373 = vpop.permute.xlu0 %1372
        %1376 = vset.pattern.permute.xlu0 0
        %1377 = vperm.xlu0 %1376, %v1355
        %v1378 = vpop.permute.xlu0 %1377
        %1381 = vset.pattern.permute.xlu0 0
        %1382 = vperm.xlu0 %1381, %v1356
        %v1383 = vpop.permute.xlu0 %1382
        %1386 = vset.pattern.permute.xlu0 0
        %1387 = vperm.xlu0 %1386, %v1357
        %v1388 = vpop.permute.xlu0 %1387
        %1391 = vset.pattern.permute.xlu0 0
        %1392 = vperm.xlu0 %1391, %v1358
        %v1393 = vpop.permute.xlu0 %1392
        %1396 = vset.pattern.permute.xlu0 0
        %1397 = vperm.xlu0 %1396, %v1359
        %v1398 = vpop.permute.xlu0 %1397
        %1400 = vmatpush.msra.mxu0 %v1340
        %1401 = vmatpush.msra.mxu0 %v1338
        %1402 = vmatpush.msra.mxu0 %v1336
        %1403 = vmatpush.msra.mxu0 %v1334
        %1404 = vmatpush.msra.mxu0 %v1332
        %1405 = vmatpush.msra.mxu0 %v1330
        %1406 = vmatpush.msra.mxu0 %v1328
        %1407 = vmatpush.msra.mxu0 %v1326
        %1408 = vmatpush.msra.mxu0 %v1324
        %1409 = vmatpush.msra.mxu0 %v1322
        %1410 = vmatpush.msra.mxu0 %v1320
        %1411 = vmatpush.msra.mxu0 %v1318
        %1412 = vmatpush.msra.mxu0 %v1316
        %1413 = vmatpush.msra.mxu0 %v1314
        %1414 = vmatpush.msra.mxu0 %v1312
        %1415 = vmatpush.msra.mxu0 %v1310
        %1416 = vmatmul.f32.gmra.mxu0 %v1343
        %v1417 = vpop.f32.mrf.mxu0
        %v1418 = vadd.f32 %v1363, %v1417
        %1419 = vmatmul.f32.gmra.mxu0 %v1344
        %v1420 = vpop.f32.mrf.mxu0
        %v1421 = vadd.f32 %v1368, %v1420
        %1422 = vmatmul.f32.gmra.mxu0 %v1345
        %v1423 = vpop.f32.mrf.mxu0
        %v1424 = vadd.f32 %v1373, %v1423
        %1425 = vmatmul.f32.gmra.mxu0 %v1346
        %v1426 = vpop.f32.mrf.mxu0
        %v1427 = vadd.f32 %v1378, %v1426
        %1428 = vmatmul.f32.gmra.mxu0 %v1347
        %v1429 = vpop.f32.mrf.mxu0
        %v1430 = vadd.f32 %v1383, %v1429
        %1431 = vmatmul.f32.gmra.mxu0 %v1348
        %v1432 = vpop.f32.mrf.mxu0
        %v1433 = vadd.f32 %v1388, %v1432
        %1434 = vmatmul.f32.gmra.mxu0 %v1349
        %v1435 = vpop.f32.mrf.mxu0
        %v1436 = vadd.f32 %v1393, %v1435
        %1437 = vmatmul.f32.gmra.mxu0 %v1350
        %v1438 = vpop.f32.mrf.mxu0
        %v1439 = vadd.f32 %v1398, %v1438
        %1440 = vdwg.mxu0
        %1441 = vmatpush.msra.mxu0 %v1341
        %1442 = vmatpush.msra.mxu0 %v1339
        %1443 = vmatpush.msra.mxu0 %v1337
        %1444 = vmatpush.msra.mxu0 %v1335
        %1445 = vmatpush.msra.mxu0 %v1333
        %1446 = vmatpush.msra.mxu0 %v1331
        %1447 = vmatpush.msra.mxu0 %v1329
        %1448 = vmatpush.msra.mxu0 %v1327
        %1449 = vmatpush.msra.mxu0 %v1325
        %1450 = vmatpush.msra.mxu0 %v1323
        %1451 = vmatpush.msra.mxu0 %v1321
        %1452 = vmatpush.msra.mxu0 %v1319
        %1453 = vmatpush.msra.mxu0 %v1317
        %1454 = vmatpush.msra.mxu0 %v1315
        %1455 = vmatpush.msra.mxu0 %v1313
        %1456 = vmatpush.msra.mxu0 %v1311
        %1457 = vmatmul.f32.gmra.mxu0 %v1343
        %v1458 = vpop.f32.mrf.mxu0
        %v1459 = vadd.f32 %v1363, %v1458
        %1460 = vmatmul.f32.gmra.mxu0 %v1344
        %v1461 = vpop.f32.mrf.mxu0
        %v1462 = vadd.f32 %v1368, %v1461
        %1463 = vmatmul.f32.gmra.mxu0 %v1345
        %v1464 = vpop.f32.mrf.mxu0
        %v1465 = vadd.f32 %v1373, %v1464
        %1466 = vmatmul.f32.gmra.mxu0 %v1346
        %v1467 = vpop.f32.mrf.mxu0
        %v1468 = vadd.f32 %v1378, %v1467
        %1469 = vmatmul.f32.gmra.mxu0 %v1347
        %v1470 = vpop.f32.mrf.mxu0
        %v1471 = vadd.f32 %v1383, %v1470
        %1472 = vmatmul.f32.gmra.mxu0 %v1348
        %v1473 = vpop.f32.mrf.mxu0
        %v1474 = vadd.f32 %v1388, %v1473
        %1475 = vmatmul.f32.gmra.mxu0 %v1349
        %v1476 = vpop.f32.mrf.mxu0
        %v1477 = vadd.f32 %v1393, %v1476
        %1478 = vmatmul.f32.gmra.mxu0 %v1350
        %v1479 = vpop.f32.mrf.mxu0
        %v1480 = vadd.f32 %v1398, %v1479
        %1481 = vdwg.mxu0
        %v1482 = vtanh.pop %v1418
        %v1483 = vtanh.pop %v1459
        %v1484 = vtanh.pop %v1421
        %v1485 = vtanh.pop %v1462
        %v1486 = vtanh.pop %v1424
        %v1487 = vtanh.pop %v1465
        %v1488 = vtanh.pop %v1427
        %v1489 = vtanh.pop %v1468
        %v1490 = vtanh.pop %v1430
        %v1491 = vtanh.pop %v1471
        %v1492 = vtanh.pop %v1433
        %v1493 = vtanh.pop %v1474
        %v1494 = vtanh.pop %v1436
        %v1495 = vtanh.pop %v1477
        %v1496 = vtanh.pop %v1439
        %v1497 = vtanh.pop %v1480
        %v1498 = vadd.f32 %v1002, %v1482
        %v1499 = vadd.f32 %v1003, %v1483
        %v1500 = vadd.f32 %v1004, %v1484
        %v1501 = vadd.f32 %v1005, %v1485
        %v1502 = vadd.f32 %v1006, %v1486
        %v1503 = vadd.f32 %v1007, %v1487
        %v1504 = vadd.f32 %v1008, %v1488
        %v1505 = vadd.f32 %v1009, %v1489
        %v1506 = vadd.f32 %v1010, %v1490
        %v1507 = vadd.f32 %v1011, %v1491
        %v1508 = vadd.f32 %v1012, %v1492
        %v1509 = vadd.f32 %v1013, %v1493
        %v1510 = vadd.f32 %v1014, %v1494
        %v1511 = vadd.f32 %v1015, %v1495
        %v1512 = vadd.f32 %v1016, %v1496
        %v1513 = vadd.f32 %v1017, %v1497
        %v1514 = vld [vmem:[%s7] sm:$0x1]
        %v1515 = vld [vmem:[#allocation2] sm:$0x1]
        %1517 = vset.pattern.permute.xlu0 0
        %1518 = vperm.xlu0 %1517, %v1515
        %v1519 = vpop.permute.xlu0 %1518
        %v1521 = vperm.slane %v1519, 0
        %v1523 = vsel %vm637, %v1514, 0
        %1525 = vmatpush.msra.mxu0 0.0
        %1526 = vmatpush.msra.mxu0 0.0
        %1527 = vmatpush.msra.mxu0 0.0
        %1528 = vmatpush.msra.mxu0 0.0
        %1529 = vmatpush.msra.mxu0 0.0
        %1530 = vmatpush.msra.mxu0 0.0
        %1531 = vmatpush.msra.mxu0 0.0
        %1532 = vmatpush.msra.mxu0 0.0
        %1533 = vmatpush.msra.mxu0 %v1512
        %1534 = vmatpush.msra.mxu0 %v1510
        %1535 = vmatpush.msra.mxu0 %v1508
        %1536 = vmatpush.msra.mxu0 %v1506
        %1537 = vmatpush.msra.mxu0 %v1504
        %1538 = vmatpush.msra.mxu0 %v1502
        %1539 = vmatpush.msra.mxu0 %v1500
        %1540 = vmatpush.msra.mxu0 %v1498
        %1541 = vmatmul.f32.gmra.mxu0 %v1523
        %v1542 = vpop.f32.mrf.mxu0
        %v1543 = vadd.f32 %v1521, %v1542
        %1544 = vdwg.mxu0
        %1545 = vmatpush.msra.mxu0 0.0
        %1546 = vmatpush.msra.mxu0 0.0
        %1547 = vmatpush.msra.mxu0 0.0
        %1548 = vmatpush.msra.mxu0 0.0
        %1549 = vmatpush.msra.mxu0 0.0
        %1550 = vmatpush.msra.mxu0 0.0
        %1551 = vmatpush.msra.mxu0 0.0
        %1552 = vmatpush.msra.mxu0 0.0
        %1553 = vmatpush.msra.mxu0 %v1513
        %1554 = vmatpush.msra.mxu0 %v1511
        %1555 = vmatpush.msra.mxu0 %v1509
        %1556 = vmatpush.msra.mxu0 %v1507
        %1557 = vmatpush.msra.mxu0 %v1505
        %1558 = vmatpush.msra.mxu0 %v1503
        %1559 = vmatpush.msra.mxu0 %v1501
        %1560 = vmatpush.msra.mxu0 %v1499
        %1561 = vmatmul.f32.gmra.mxu0 %v1523
        %v1562 = vpop.f32.mrf.mxu0
        %v1563 = vadd.f32 %v1521, %v1562
        %1564 = vdwg.mxu0
        %v1567 = vrot.slane %v1563, 7
        %vm1568 = vcmask 1040384
        %v1569 = vsel %vm1568, %v1543, %v1567
        %v1571 = vlaneseq
        %vm1572 = vcmp.ge.s32.totalorder %v1571, 0
        %vm1573 = vcmp.lt.s32.totalorder %v1571, 256
        %vm1574 = vmand %vm1572, %vm1573
        %1575 = vst.msk [vmem:[%s328] sm:$0x3] %vm1574, %v1569
        %s1576 = sand.u32 %s227, 1
        %s1577 = scalar_lea.sflag [#allocation4], %s1576
        %s1578 = sand.u32 %s227, 1
        %s1579 = smul.addr %s1578, 2
        %s1580 = scalar_lea.vmem [#allocation3], %s1579
        // Predicated region
        $region57: #{tpu_custom_call.1} parent=55 // pred_check
          %p1581 = pneg %p237
        $region58: #{tpu_custom_call.1} parent=55 // pred_check_branch
          %1583 = sbr.rel (%p1581) target = $region60
        $region59: #{tpu_custom_call.1} parent=55 // pred_region
          %s1584 = smul.u32 2, %s25
          %1586 = vsyncadd %s1577, 0
          %s1587 = scalar_lea.hbm %s9, %s1584
          %s1589 = sshll.u32 %s1580, 4
          %s1590 = int_to_ptr.vmem [resolvable:$true] %s1589
          %s1591 = sshll.u32 %s1587, 4
          %s1592 = int_to_ptr.hbm [resolvable:$true] %s1591
          %1594 = dma.vmem_to_hbm [thread:$0]  %s1590, 32, %s1592, %s1577
        $region60: #{tpu_custom_call.1} parent=55 // pred_fallthru
          _
      $region56: #{tpu_custom_call.1} parent=5 // pred_fallthru
        _
      %p1595 = scmp.le.s32.totalorder 2, %s20
      // Predicated region
      $region61: #{tpu_custom_call.1} parent=5 // pred_check
        %p1596 = pneg %p1595
      $region62: #{tpu_custom_call.1} parent=5 // pred_check_branch
        %1598 = sbr.rel (%p1596) target = $region64
      $region63: #{tpu_custom_call.1} parent=5 // pred_region
        %s1599 = ssub.s32 %s20, 2
        // Predicated region
        $region65: #{tpu_custom_call.1} parent=63 // pred_check
          %p1600 = pneg %p243
        $region66: #{tpu_custom_call.1} parent=63 // pred_check_branch
          %1602 = sbr.rel (%p1600) target = $region68
        $region67: #{tpu_custom_call.1} parent=63 // pred_region
          %s1603 = sand.u32 %s228, 1
          %s1604 = scalar_lea.sflag [#allocation4], %s1603
          %s1605 = sand.u32 %s228, 1
          %s1606 = smul.addr %s1605, 2
          %s1607 = scalar_lea.vmem [#allocation3], %s1606
          %1609 = dma.done %s1604, 32
        $region68: #{tpu_custom_call.1} parent=63 // pred_fallthru
          _
      $region64: #{tpu_custom_call.1} parent=5 // pred_fallthru
        _
    $region6: #{tpu_custom_call.1} parent=1 // loop_footer
      %s24 = sadd.s32 1, %s20
    $region7: #{tpu_custom_call.1} parent=1 // loop_footer_branch
      %19 = sbr.rel target = $region3
    $region8: #{tpu_custom_call.1} parent=1 // loop_exit
      _
    %1610 = vsyncpa [#allocation4], 1
    %s1611 = scalar_lea.sflag [#allocation4], 1
    %1612 = vsyncpa %s1611, 1

</llo_original>
